<compile_context>
chip_gen: v5e
topology: v5e:2x2
jax: 0.10.0
libtpu: 0.0.40
codegen_flags: <defaults>
</compile_context>

<pallas_src>
import functools

import jax
import jax.numpy as jnp
from jax.experimental import pallas as pl
from jax.experimental.pallas import tpu as pltpu


# ----------------------------------------------------------------------------
# In-kernel helpers
# ----------------------------------------------------------------------------
def _normalize(x, eps=1e-5):
    """LayerNorm without the affine part (gamma/beta applied separately)."""
    mu = jnp.mean(x, axis=-1, keepdims=True)
    var = jnp.mean((x - mu) ** 2, axis=-1, keepdims=True)
    return (x - mu) * jax.lax.rsqrt(var + eps)


# ----------------------------------------------------------------------------
# Fused encoder kernel: grid = (batch_blocks, depth); depth innermost ("arbitrary")
# ----------------------------------------------------------------------------
def _ahl_encoder_kernel(ht_ref, ha_ref, hv_ref, hh_ref,
                        vecs_ref, wq_ref, wa_ref, wv_ref, wo_ref,
                        out_ref,
                        hh_acc, ah_sc, vh_sc,
                        *, heads, dim_head, bb, n):
    i = pl.program_id(1)                       # layer index (depth axis)
    inner = heads * dim_head
    f32, bf16 = jnp.float32, jnp.bfloat16

    # First layer of this batch block: seed the resident h_hyper accumulator and hoist the
    # layer-invariant (pre-affine) LayerNorm of h_a / h_v into VMEM scratch.
    @pl.when(i == 0)
    def _():
        hh_acc[...] = hh_ref[...].astype(f32)
        ah_sc[...] = _normalize(ha_ref[...].astype(f32))
        vh_sc[...] = _normalize(hv_ref[...].astype(f32))

    vecs = vecs_ref[...].astype(f32)           # (9, D): g1,b1,g2,b2,g3,b3,g4,b4,bo
    t = (_normalize(ht_ref[...].astype(f32)) * vecs[0:1] + vecs[1:2]).astype(bf16)  # norm1(h_t_i)
    a = (ah_sc[...] * vecs[2:3] + vecs[3:4]).astype(bf16)                           # norm2(h_a)
    v = (vh_sc[...] * vecs[4:5] + vecs[5:6]).astype(bf16)                           # norm3(h_v)
    hh = _normalize(hh_acc[...]) * vecs[6:7] + vecs[7:8]                            # norm4(h_hyper)
    bo = vecs[8:9]

    # Projections on the full (bb*n, D) slab; bf16 MXU operands, f32 accumulation.
    # Softmax scale is already folded into wq.
    q = jnp.dot(t, wq_ref[...], preferred_element_type=f32).astype(bf16)    # (bb*n, inner)
    kva = jnp.dot(a, wa_ref[...], preferred_element_type=f32).astype(bf16)  # (bb*n, 2*inner) = [k_ta | v_ta]
    kvv = jnp.dot(v, wv_ref[...], preferred_element_type=f32).astype(bf16)  # (bb*n, 2*inner) = [k_tv | v_tv]

    dn = (((1,), (1,)), ((), ()))   # contract last dims of both operands (no explicit transpose)

    # Attention per (batch element, head); the two sources are merged into one score matmul
    # (N, 2N) and one PV matmul, whose accumulation directly yields o_ta + o_tv.
    # TODO(synk): for large real dim_head a head-major (heads, N, d) layout would avoid the
    # sub-128-lane slices; at these sizes the slice cost is negligible.
    o_rows = []
    for b in range(bb):                        # static unroll over batch elements in the block
        r = slice(b * n, (b + 1) * n)
        heads_out = []
        for h in range(heads):                 # static unroll over heads
            lo, hi = h * dim_head, (h + 1) * dim_head
            qh = q[r, lo:hi]                                                   # (n, d)
            k_cat = jnp.concatenate([kva[r, lo:hi], kvv[r, lo:hi]], axis=0)    # (2n, d)
            v_cat = jnp.concatenate([kva[r, inner + lo:inner + hi],
                                     kvv[r, inner + lo:inner + hi]], axis=0)   # (2n, d)
            dots = jax.lax.dot_general(qh, k_cat, dn, preferred_element_type=f32)  # (n, 2n)
            d1, d2 = dots[:, :n], dots[:, n:]
            p1 = jnp.exp(d1 - jnp.max(d1, axis=-1, keepdims=True))
            p2 = jnp.exp(d2 - jnp.max(d2, axis=-1, keepdims=True))
            p1 = p1 * pl.reciprocal(jnp.sum(p1, axis=-1, keepdims=True), approx=True)
            p2 = p2 * pl.reciprocal(jnp.sum(p2, axis=-1, keepdims=True), approx=True)
            p_cat = jnp.concatenate([p1, p2], axis=-1).astype(bf16)            # (n, 2n)
            heads_out.append(jnp.dot(p_cat, v_cat, preferred_element_type=f32))  # (n, d) = o_ta+o_tv
        o_rows.append(jnp.concatenate(heads_out, axis=-1))                     # (n, inner)
    o = jnp.concatenate(o_rows, axis=0).astype(bf16)                           # (bb*n, inner)

    # to_out (Linear with bias); project_out == True for heads != 1.
    # TODO(synk): project_out == False (nn.Identity) branch is not specialized here.
    shift = jnp.dot(o, wo_ref[...], preferred_element_type=f32) + bo
    hh_new = hh + shift
    hh_acc[...] = hh_new                       # carry to the next layer (stays in VMEM)

    @pl.when(i == pl.num_programs(1) - 1)
    def _():
        out_ref[...] = hh_new.astype(out_ref.dtype)


# ----------------------------------------------------------------------------
# Wrapper
# ----------------------------------------------------------------------------
def hhyper_learning_encoder(h_t_list, h_a, h_v, h_hyper, params, *,
                            heads, dim_head, num_batch_blocks=1):
    vecs, wq, wa, wv, wo = (params[k] for k in ("vecs", "wq", "wa", "wv", "wo"))
    h_t = jnp.stack(h_t_list, axis=0) if isinstance(h_t_list, (list, tuple)) else h_t_list
    depth, B, N, D = h_t.shape
    inner = heads * dim_head
    assert B % num_batch_blocks == 0, "batch must divide num_batch_blocks"
    bb = B // num_batch_blocks                 # batch elements per block
    bbn = bb * N

    # Flatten (B, N, D) -> (B*N, D) on the wrapper side: projections see a tall slab and the
    # kernel never reshapes.
    ht2 = h_t.reshape(depth, B * N, D)
    ha2 = h_a.reshape(B * N, D)
    hv2 = h_v.reshape(B * N, D)
    hh2 = h_hyper.reshape(B * N, D)

    kernel = functools.partial(_ahl_encoder_kernel,
                               heads=heads, dim_head=dim_head, bb=bb, n=N)
    layer_idx = lambda b, i: (i, 0, 0)

    # Advisory cost estimate for XLA scheduling around the fused call.
    flops = depth * B * (2 * N * D * 5 * inner                    # q / packed-kv projections
                         + heads * 2 * (2 * N * (2 * N) * dim_head)  # scores + PV matmuls
                         + 2 * N * inner * D)                      # output projection
    transcendentals = depth * B * heads * N * 2 * N                # exp count
    bytes_accessed = ((h_t.size + 3 * h_a.size + B * N * D) * 4
                      + (wq.size + wa.size + wv.size + wo.size) * 2
                      + vecs.size * 4)

    out = pl.pallas_call(
        kernel,
        out_shape=jax.ShapeDtypeStruct((B * N, D), h_hyper.dtype),
        grid=(num_batch_blocks, depth),        # depth innermost: weights streamed once per layer
        in_specs=[
            pl.BlockSpec((None, bbn, D), lambda b, i: (i, b, 0)),   # h_t (layer i, batch block b)
            pl.BlockSpec((bbn, D), lambda b, i: (b, 0)),            # h_a
            pl.BlockSpec((bbn, D), lambda b, i: (b, 0)),            # h_v
            pl.BlockSpec((bbn, D), lambda b, i: (b, 0)),            # h_hyper (seed)
            pl.BlockSpec((None, 9, D), layer_idx),                  # packed LN vectors + bo (f32)
            pl.BlockSpec((None, D, inner), layer_idx),              # Wq * scale        (bf16)
            pl.BlockSpec((None, D, 2 * inner), layer_idx),          # [Wk_ta | Wv_ta]   (bf16)
            pl.BlockSpec((None, D, 2 * inner), layer_idx),          # [Wk_tv | Wv_tv]   (bf16)
            pl.BlockSpec((None, inner, D), layer_idx),              # Wo                (bf16)
        ],
        out_specs=pl.BlockSpec((bbn, D), lambda b, i: (b, 0)),      # same block across depth
        scratch_shapes=[
            pltpu.VMEM((bbn, D), jnp.float32),   # resident h_hyper accumulator
            pltpu.VMEM((bbn, D), jnp.float32),   # hoisted normalized h_a (pre-affine)
            pltpu.VMEM((bbn, D), jnp.float32),   # hoisted normalized h_v (pre-affine)
        ],
        compiler_params=pltpu.CompilerParams(
            dimension_semantics=("parallel", "arbitrary"),
            vmem_limit_bytes=64 * 1024 * 1024),
        cost_estimate=pl.CostEstimate(flops=int(flops),
                                      transcendentals=int(transcendentals),
                                      bytes_accessed=int(bytes_accessed)),
    )(ht2, ha2, hv2, hh2, vecs, wq, wa, wv, wo)
    return out.reshape(B, N, D)


# ----------------------------------------------------------------------------
# Deterministic parameter init (shapes per module __init__; weights stored (in, out)).
# One-time preprocessing: softmax scale folded into Wq; K/V weights packed; weights cast bf16.
# ----------------------------------------------------------------------------
def init_params(key, dim, depth, heads, dim_head, dtype=jnp.float32):
    inner = heads * dim_head
    scale = dim_head ** (-0.5)
    ks = jax.random.split(key, 9)

    def nrm(k, shape, s):
        return jax.random.normal(k, shape, dtype) * s

    # LayerNorm params slightly off identity so gamma/beta math is exercised.
    g = 1.0 + 0.1 * jax.random.normal(ks[0], (depth, 4, dim), dtype)
    b = 0.05 * jax.random.normal(ks[1], (depth, 4, dim), dtype)
    bo = 0.02 * jax.random.normal(ks[2], (depth, 1, dim), dtype)
    vecs = jnp.concatenate(
        [jnp.stack([g[:, 0], b[:, 0], g[:, 1], b[:, 1],
                    g[:, 2], b[:, 2], g[:, 3], b[:, 3]], axis=1), bo],
        axis=1)                                                   # (depth, 9, dim) f32

    wq = nrm(ks[3], (depth, dim, inner), 0.1) * scale             # fold dim_head^-0.5 into Wq
    wk_ta = nrm(ks[4], (depth, dim, inner), 0.1)
    wv_ta = nrm(ks[5], (depth, dim, inner), 0.1)
    wk_tv = nrm(ks[6], (depth, dim, inner), 0.1)
    wv_tv = nrm(ks[7], (depth, dim, inner), 0.1)
    wo = nrm(ks[8], (depth, inner, dim), 0.1)

    bf = lambda w: w.astype(jnp.bfloat16)    # bf16 weights in HBM: half the DMA bytes, bf16 MXU
    return dict(vecs=vecs,
                wq=bf(wq),
                wa=bf(jnp.concatenate([wk_ta, wv_ta], axis=-1)),
                wv=bf(jnp.concatenate([wk_tv, wv_tv], axis=-1)),
                wo=bf(wo))


# ----------------------------------------------------------------------------
# Pure-JAX reference (sanity check) — mirrors the kernel's bf16-operand / f32-accum policy.
# ----------------------------------------------------------------------------
def _ref_forward(h_t_stack, h_a, h_v, h_hyper, params, *, heads, dim_head):
    f32, bf16 = jnp.float32, jnp.bfloat16

    def ln(x, g, b, eps=1e-5):
        mu = jnp.mean(x, -1, keepdims=True)
        var = jnp.mean((x - mu) ** 2, -1, keepdims=True)
        return (x - mu) * jax.lax.rsqrt(var + eps) * g + b

    def mm(x, w):   # (..., D) @ (D, M): bf16 operands, f32 accumulation
        return jax.lax.dot_general(x.astype(bf16), w.astype(bf16),
                                   (((x.ndim - 1,), (0,)), ((), ())),
                                   preferred_element_type=f32)

    vecs, wq, wa, wv, wo = (params[k] for k in ("vecs", "wq", "wa", "wv", "wo"))
    depth = wq.shape[0]
    inner = heads * dim_head
    h_a, h_v, h_hyper = (x.astype(f32) for x in (h_a, h_v, h_hyper))

    def split_heads(x):
        B, N, _ = x.shape
        return x.reshape(B, N, heads, dim_head).transpose(0, 2, 1, 3)

    for i in range(depth):
        t = ln(h_t_stack[i].astype(f32), vecs[i, 0], vecs[i, 1])
        a = ln(h_a, vecs[i, 2], vecs[i, 3])
        v = ln(h_v, vecs[i, 4], vecs[i, 5])
        hh = ln(h_hyper, vecs[i, 6], vecs[i, 7])
        bo = vecs[i, 8]

        q = split_heads(mm(t, wq[i]).astype(bf16))     # scale already folded into wq
        kva = mm(a, wa[i]).astype(bf16)
        kvv = mm(v, wv[i]).astype(bf16)
        k_ta, v_ta = map(split_heads, (kva[..., :inner], kva[..., inner:]))
        k_tv, v_tv = map(split_heads, (kvv[..., :inner], kvv[..., inner:]))

        def attend(k, vv):
            dots = jnp.einsum("bhid,bhjd->bhij", q, k, preferred_element_type=f32)
            p = jax.nn.softmax(dots, axis=-1).astype(bf16)
            return jnp.einsum("bhij,bhjd->bhid", p, vv, preferred_element_type=f32)

        o = attend(k_ta, v_ta) + attend(k_tv, v_tv)
        B_, N_ = o.shape[0], o.shape[2]
        o = o.transpose(0, 2, 1, 3).reshape(B_, N_, inner)
        h_hyper = hh + mm(o, wo[i]) + bo
    return h_hyper


# ----------------------------------------------------------------------------
# Main
# ----------------------------------------------------------------------------
if __name__ == "__main__":
    dim, depth, heads, dim_head = 32, 2, 2, 16
    B, N = 2, 8

    key = jax.random.PRNGKey(0)
    k_t, k_a, k_v, k_h, k_p = jax.random.split(key, 5)
    h_t_list = [jax.random.normal(k, (B, N, dim), jnp.float32)
                for k in jax.random.split(k_t, depth)]
    h_a = jax.random.normal(k_a, (B, N, dim), jnp.float32)
    h_v = jax.random.normal(k_v, (B, N, dim), jnp.float32)
    h_hyper = jax.random.normal(k_h, (B, N, dim), jnp.float32)
    params = init_params(k_p, dim, depth, heads, dim_head)

    out = hhyper_learning_encoder(h_t_list, h_a, h_v, h_hyper, params,
                                  heads=heads, dim_head=dim_head)
    out = jax.block_until_ready(out)

    ref = _ref_forward(jnp.stack(h_t_list, 0), h_a, h_v, h_hyper, params,
                       heads=heads, dim_head=dim_head)
    assert out.shape == (B, N, dim)
    # Tolerance accounts for the deliberate approx reciprocal + bf16 MXU operands.
    assert jnp.allclose(out, ref, atol=1e-2, rtol=1e-2), "mismatch vs JAX reference"

    print("KERNEL_OK")
</pallas_src>

<mosaic_0001>
module attributes {stable_mosaic.version = 11 : i64} {
  func.func @_ahl_encoder_kernel(%arg0: i32, %arg1: i32, %arg2: memref<1x16x32xf32, #tpu.memory_space<vmem>>, %arg3: memref<16x32xf32, #tpu.memory_space<vmem>>, %arg4: memref<16x32xf32, #tpu.memory_space<vmem>>, %arg5: memref<16x32xf32, #tpu.memory_space<vmem>>, %arg6: memref<1x9x32xf32, #tpu.memory_space<vmem>>, %arg7: memref<1x32x32xbf16, #tpu.memory_space<vmem>>, %arg8: memref<1x32x64xbf16, #tpu.memory_space<vmem>>, %arg9: memref<1x32x64xbf16, #tpu.memory_space<vmem>>, %arg10: memref<1x32x32xbf16, #tpu.memory_space<vmem>>, %arg11: memref<16x32xf32, #tpu.memory_space<vmem>>, %arg12: memref<16x32xf32, #tpu.memory_space<vmem>>, %arg13: memref<16x32xf32, #tpu.memory_space<vmem>>, %arg14: memref<16x32xf32, #tpu.memory_space<vmem>>) attributes {dimension_semantics = [#tpu.dimension_semantics<parallel>, #tpu.dimension_semantics<arbitrary>], iteration_bounds = array<i64: 1, 2>, scalar_prefetch = 0 : i64, scratch_operands = 3 : i64, tpu.core_type = #tpu.core_type<tc>, window_params = [{transform_indices = @transform_0, window_bounds = array<i64: 1, 16, 32>}, {transform_indices = @transform_1, window_bounds = array<i64: 16, 32>}, {transform_indices = @transform_2, window_bounds = array<i64: 16, 32>}, {transform_indices = @transform_3, window_bounds = array<i64: 16, 32>}, {transform_indices = @transform_4, window_bounds = array<i64: 1, 9, 32>}, {transform_indices = @transform_5, window_bounds = array<i64: 1, 32, 32>}, {transform_indices = @transform_6, window_bounds = array<i64: 1, 32, 64>}, {transform_indices = @transform_7, window_bounds = array<i64: 1, 32, 64>}, {transform_indices = @transform_8, window_bounds = array<i64: 1, 32, 32>}, {transform_indices = @transform_9, window_bounds = array<i64: 16, 32>}]} {
    %c0_i32 = arith.constant 0 : i32
    %0 = arith.cmpi eq, %arg1, %c0_i32 : i32
    %1 = arith.extui %0 : i1 to i32
    %c0_i32_0 = arith.constant 0 : i32
    %2 = arith.cmpi ne, %1, %c0_i32_0 : i32
    scf.if %2 {
      %c0_64 = arith.constant 0 : index
      %c0_65 = arith.constant 0 : index
      %232 = vector.load %arg5[%c0_64, %c0_65] : memref<16x32xf32, #tpu.memory_space<vmem>>, vector<16x32xf32>
      %c0_66 = arith.constant 0 : index
      %c0_67 = arith.constant 0 : index
      %233 = vector.load %arg12[%c0_66, %c0_67] : memref<16x32xf32, #tpu.memory_space<vmem>>, vector<16x32xf32>
      tpu.vector_store %arg12[%c0_66, %c0_67], %232 {strides = array<i32>} : memref<16x32xf32, #tpu.memory_space<vmem>>, vector<16x32xf32>,
      %c0_68 = arith.constant 0 : index
      %c0_69 = arith.constant 0 : index
      %234 = vector.load %arg3[%c0_68, %c0_69] : memref<16x32xf32, #tpu.memory_space<vmem>>, vector<16x32xf32>
      %cst_70 = arith.constant dense<0.000000e+00> : vector<16xf32>
      %235 = vector.multi_reduction <add>, %234, %cst_70 [1] : vector<16x32xf32> to vector<16xf32>
      %236 = vector.shape_cast %235 : vector<16xf32> to vector<16x1xf32>
      %cst_71 = arith.constant 3.200000e+01 : f32
      %237 = vector.broadcast %cst_71 : f32 to vector<16x1xf32>
      %238 = arith.divf %236, %237 : vector<16x1xf32>
      %239 = vector.broadcast %238 : vector<16x1xf32> to vector<16x32xf32>
      %240 = arith.subf %234, %239 : vector<16x32xf32>
      %241 = arith.mulf %240, %240 : vector<16x32xf32>
      %cst_72 = arith.constant dense<0.000000e+00> : vector<16xf32>
      %242 = vector.multi_reduction <add>, %241, %cst_72 [1] : vector<16x32xf32> to vector<16xf32>
      %243 = vector.shape_cast %242 : vector<16xf32> to vector<16x1xf32>
      %cst_73 = arith.constant 3.200000e+01 : f32
      %244 = vector.broadcast %cst_73 : f32 to vector<16x1xf32>
      %245 = arith.divf %243, %244 : vector<16x1xf32>
      %246 = vector.broadcast %238 : vector<16x1xf32> to vector<16x32xf32>
      %247 = arith.subf %234, %246 : vector<16x32xf32>
      %cst_74 = arith.constant 9.99999974E-6 : f32
      %248 = vector.broadcast %cst_74 : f32 to vector<16x1xf32>
      %249 = arith.addf %245, %248 : vector<16x1xf32>
      %250 = math.rsqrt %249 : vector<16x1xf32>
      %251 = vector.broadcast %250 : vector<16x1xf32> to vector<16x32xf32>
      %252 = arith.mulf %247, %251 : vector<16x32xf32>
      %c0_75 = arith.constant 0 : index
      %c0_76 = arith.constant 0 : index
      %253 = vector.load %arg13[%c0_75, %c0_76] : memref<16x32xf32, #tpu.memory_space<vmem>>, vector<16x32xf32>
      tpu.vector_store %arg13[%c0_75, %c0_76], %252 {strides = array<i32>} : memref<16x32xf32, #tpu.memory_space<vmem>>, vector<16x32xf32>,
      %c0_77 = arith.constant 0 : index
      %c0_78 = arith.constant 0 : index
      %254 = vector.load %arg4[%c0_77, %c0_78] : memref<16x32xf32, #tpu.memory_space<vmem>>, vector<16x32xf32>
      %cst_79 = arith.constant dense<0.000000e+00> : vector<16xf32>
      %255 = vector.multi_reduction <add>, %254, %cst_79 [1] : vector<16x32xf32> to vector<16xf32>
      %256 = vector.shape_cast %255 : vector<16xf32> to vector<16x1xf32>
      %cst_80 = arith.constant 3.200000e+01 : f32
      %257 = vector.broadcast %cst_80 : f32 to vector<16x1xf32>
      %258 = arith.divf %256, %257 : vector<16x1xf32>
      %259 = vector.broadcast %258 : vector<16x1xf32> to vector<16x32xf32>
      %260 = arith.subf %254, %259 : vector<16x32xf32>
      %261 = arith.mulf %260, %260 : vector<16x32xf32>
      %cst_81 = arith.constant dense<0.000000e+00> : vector<16xf32>
      %262 = vector.multi_reduction <add>, %261, %cst_81 [1] : vector<16x32xf32> to vector<16xf32>
      %263 = vector.shape_cast %262 : vector<16xf32> to vector<16x1xf32>
      %cst_82 = arith.constant 3.200000e+01 : f32
      %264 = vector.broadcast %cst_82 : f32 to vector<16x1xf32>
      %265 = arith.divf %263, %264 : vector<16x1xf32>
      %266 = vector.broadcast %258 : vector<16x1xf32> to vector<16x32xf32>
      %267 = arith.subf %254, %266 : vector<16x32xf32>
      %cst_83 = arith.constant 9.99999974E-6 : f32
      %268 = vector.broadcast %cst_83 : f32 to vector<16x1xf32>
      %269 = arith.addf %265, %268 : vector<16x1xf32>
      %270 = math.rsqrt %269 : vector<16x1xf32>
      %271 = vector.broadcast %270 : vector<16x1xf32> to vector<16x32xf32>
      %272 = arith.mulf %267, %271 : vector<16x32xf32>
      %c0_84 = arith.constant 0 : index
      %c0_85 = arith.constant 0 : index
      %273 = vector.load %arg14[%c0_84, %c0_85] : memref<16x32xf32, #tpu.memory_space<vmem>>, vector<16x32xf32>
      tpu.vector_store %arg14[%c0_84, %c0_85], %272 {strides = array<i32>} : memref<16x32xf32, #tpu.memory_space<vmem>>, vector<16x32xf32>,
    } else {
    }
    %c0 = arith.constant 0 : index
    %c0_1 = arith.constant 0 : index
    %c0_2 = arith.constant 0 : index
    %3 = vector.load %arg6[%c0, %c0_1, %c0_2] : memref<1x9x32xf32, #tpu.memory_space<vmem>>, vector<1x9x32xf32>
    %4 = vector.shape_cast %3 : vector<1x9x32xf32> to vector<9x32xf32>
    %c0_3 = arith.constant 0 : index
    %c0_4 = arith.constant 0 : index
    %c0_5 = arith.constant 0 : index
    %5 = vector.load %arg2[%c0_3, %c0_4, %c0_5] : memref<1x16x32xf32, #tpu.memory_space<vmem>>, vector<1x16x32xf32>
    %6 = vector.shape_cast %5 : vector<1x16x32xf32> to vector<16x32xf32>
    %cst = arith.constant dense<0.000000e+00> : vector<16xf32>
    %7 = vector.multi_reduction <add>, %6, %cst [1] : vector<16x32xf32> to vector<16xf32>
    %8 = vector.shape_cast %7 : vector<16xf32> to vector<16x1xf32>
    %cst_6 = arith.constant 3.200000e+01 : f32
    %9 = vector.broadcast %cst_6 : f32 to vector<16x1xf32>
    %10 = arith.divf %8, %9 : vector<16x1xf32>
    %11 = vector.broadcast %10 : vector<16x1xf32> to vector<16x32xf32>
    %12 = arith.subf %6, %11 : vector<16x32xf32>
    %13 = arith.mulf %12, %12 : vector<16x32xf32>
    %cst_7 = arith.constant dense<0.000000e+00> : vector<16xf32>
    %14 = vector.multi_reduction <add>, %13, %cst_7 [1] : vector<16x32xf32> to vector<16xf32>
    %15 = vector.shape_cast %14 : vector<16xf32> to vector<16x1xf32>
    %cst_8 = arith.constant 3.200000e+01 : f32
    %16 = vector.broadcast %cst_8 : f32 to vector<16x1xf32>
    %17 = arith.divf %15, %16 : vector<16x1xf32>
    %18 = vector.broadcast %10 : vector<16x1xf32> to vector<16x32xf32>
    %19 = arith.subf %6, %18 : vector<16x32xf32>
    %cst_9 = arith.constant 9.99999974E-6 : f32
    %20 = vector.broadcast %cst_9 : f32 to vector<16x1xf32>
    %21 = arith.addf %17, %20 : vector<16x1xf32>
    %22 = math.rsqrt %21 : vector<16x1xf32>
    %23 = vector.broadcast %22 : vector<16x1xf32> to vector<16x32xf32>
    %24 = arith.mulf %19, %23 : vector<16x32xf32>
    %25 = vector.extract_strided_slice %4 {offsets = [0, 0], sizes = [1, 32], strides = [1, 1]} : vector<9x32xf32> to vector<1x32xf32>
    %26 = vector.broadcast %25 : vector<1x32xf32> to vector<16x32xf32>
    %27 = arith.mulf %24, %26 : vector<16x32xf32>
    %28 = vector.extract_strided_slice %4 {offsets = [1, 0], sizes = [1, 32], strides = [1, 1]} : vector<9x32xf32> to vector<1x32xf32>
    %29 = vector.broadcast %28 : vector<1x32xf32> to vector<16x32xf32>
    %30 = arith.addf %27, %29 : vector<16x32xf32>
    %31 = arith.truncf %30 : vector<16x32xf32> to vector<16x32xbf16>
    %c0_10 = arith.constant 0 : index
    %c0_11 = arith.constant 0 : index
    %32 = vector.load %arg13[%c0_10, %c0_11] : memref<16x32xf32, #tpu.memory_space<vmem>>, vector<16x32xf32>
    %33 = vector.extract_strided_slice %4 {offsets = [2, 0], sizes = [1, 32], strides = [1, 1]} : vector<9x32xf32> to vector<1x32xf32>
    %34 = vector.broadcast %33 : vector<1x32xf32> to vector<16x32xf32>
    %35 = arith.mulf %32, %34 : vector<16x32xf32>
    %36 = vector.extract_strided_slice %4 {offsets = [3, 0], sizes = [1, 32], strides = [1, 1]} : vector<9x32xf32> to vector<1x32xf32>
    %37 = vector.broadcast %36 : vector<1x32xf32> to vector<16x32xf32>
    %38 = arith.addf %35, %37 : vector<16x32xf32>
    %39 = arith.truncf %38 : vector<16x32xf32> to vector<16x32xbf16>
    %c0_12 = arith.constant 0 : index
    %c0_13 = arith.constant 0 : index
    %40 = vector.load %arg14[%c0_12, %c0_13] : memref<16x32xf32, #tpu.memory_space<vmem>>, vector<16x32xf32>
    %41 = vector.extract_strided_slice %4 {offsets = [4, 0], sizes = [1, 32], strides = [1, 1]} : vector<9x32xf32> to vector<1x32xf32>
    %42 = vector.broadcast %41 : vector<1x32xf32> to vector<16x32xf32>
    %43 = arith.mulf %40, %42 : vector<16x32xf32>
    %44 = vector.extract_strided_slice %4 {offsets = [5, 0], sizes = [1, 32], strides = [1, 1]} : vector<9x32xf32> to vector<1x32xf32>
    %45 = vector.broadcast %44 : vector<1x32xf32> to vector<16x32xf32>
    %46 = arith.addf %43, %45 : vector<16x32xf32>
    %47 = arith.truncf %46 : vector<16x32xf32> to vector<16x32xbf16>
    %c0_14 = arith.constant 0 : index
    %c0_15 = arith.constant 0 : index
    %48 = vector.load %arg12[%c0_14, %c0_15] : memref<16x32xf32, #tpu.memory_space<vmem>>, vector<16x32xf32>
    %cst_16 = arith.constant dense<0.000000e+00> : vector<16xf32>
    %49 = vector.multi_reduction <add>, %48, %cst_16 [1] : vector<16x32xf32> to vector<16xf32>
    %50 = vector.shape_cast %49 : vector<16xf32> to vector<16x1xf32>
    %cst_17 = arith.constant 3.200000e+01 : f32
    %51 = vector.broadcast %cst_17 : f32 to vector<16x1xf32>
    %52 = arith.divf %50, %51 : vector<16x1xf32>
    %53 = vector.broadcast %52 : vector<16x1xf32> to vector<16x32xf32>
    %54 = arith.subf %48, %53 : vector<16x32xf32>
    %55 = arith.mulf %54, %54 : vector<16x32xf32>
    %cst_18 = arith.constant dense<0.000000e+00> : vector<16xf32>
    %56 = vector.multi_reduction <add>, %55, %cst_18 [1] : vector<16x32xf32> to vector<16xf32>
    %57 = vector.shape_cast %56 : vector<16xf32> to vector<16x1xf32>
    %cst_19 = arith.constant 3.200000e+01 : f32
    %58 = vector.broadcast %cst_19 : f32 to vector<16x1xf32>
    %59 = arith.divf %57, %58 : vector<16x1xf32>
    %60 = vector.broadcast %52 : vector<16x1xf32> to vector<16x32xf32>
    %61 = arith.subf %48, %60 : vector<16x32xf32>
    %cst_20 = arith.constant 9.99999974E-6 : f32
    %62 = vector.broadcast %cst_20 : f32 to vector<16x1xf32>
    %63 = arith.addf %59, %62 : vector<16x1xf32>
    %64 = math.rsqrt %63 : vector<16x1xf32>
    %65 = vector.broadcast %64 : vector<16x1xf32> to vector<16x32xf32>
    %66 = arith.mulf %61, %65 : vector<16x32xf32>
    %67 = vector.extract_strided_slice %4 {offsets = [6, 0], sizes = [1, 32], strides = [1, 1]} : vector<9x32xf32> to vector<1x32xf32>
    %68 = vector.broadcast %67 : vector<1x32xf32> to vector<16x32xf32>
    %69 = arith.mulf %66, %68 : vector<16x32xf32>
    %70 = vector.extract_strided_slice %4 {offsets = [7, 0], sizes = [1, 32], strides = [1, 1]} : vector<9x32xf32> to vector<1x32xf32>
    %71 = vector.broadcast %70 : vector<1x32xf32> to vector<16x32xf32>
    %72 = arith.addf %69, %71 : vector<16x32xf32>
    %73 = vector.extract_strided_slice %4 {offsets = [8, 0], sizes = [1, 32], strides = [1, 1]} : vector<9x32xf32> to vector<1x32xf32>
    %c0_21 = arith.constant 0 : index
    %c0_22 = arith.constant 0 : index
    %c0_23 = arith.constant 0 : index
    %74 = vector.load %arg7[%c0_21, %c0_22, %c0_23] : memref<1x32x32xbf16, #tpu.memory_space<vmem>>, vector<1x32x32xbf16>
    %75 = vector.shape_cast %74 : vector<1x32x32xbf16> to vector<32x32xbf16>
    %cst_24 = arith.constant dense<0.000000e+00> : vector<16x32xf32>
    %76 = tpu.matmul %31, %75, %cst_24 {dimension_numbers = #tpu.dot_dimension_numbers<[1], [0], [0], [1], [0, 0, 1, 1], [], []>} : vector<16x32xbf16>, vector<32x32xbf16>, vector<16x32xf32> -> vector<16x32xf32>
    %77 = arith.truncf %76 : vector<16x32xf32> to vector<16x32xbf16>
    %c0_25 = arith.constant 0 : index
    %c0_26 = arith.constant 0 : index
    %c0_27 = arith.constant 0 : index
    %78 = vector.load %arg8[%c0_25, %c0_26, %c0_27] : memref<1x32x64xbf16, #tpu.memory_space<vmem>>, vector<1x32x64xbf16>
    %79 = vector.shape_cast %78 : vector<1x32x64xbf16> to vector<32x64xbf16>
    %cst_28 = arith.constant dense<0.000000e+00> : vector<16x64xf32>
    %80 = tpu.matmul %39, %79, %cst_28 {dimension_numbers = #tpu.dot_dimension_numbers<[1], [0], [0], [1], [0, 0, 1, 1], [], []>} : vector<16x32xbf16>, vector<32x64xbf16>, vector<16x64xf32> -> vector<16x64xf32>
    %81 = arith.truncf %80 : vector<16x64xf32> to vector<16x64xbf16>
    %c0_29 = arith.constant 0 : index
    %c0_30 = arith.constant 0 : index
    %c0_31 = arith.constant 0 : index
    %82 = vector.load %arg9[%c0_29, %c0_30, %c0_31] : memref<1x32x64xbf16, #tpu.memory_space<vmem>>, vector<1x32x64xbf16>
    %83 = vector.shape_cast %82 : vector<1x32x64xbf16> to vector<32x64xbf16>
    %cst_32 = arith.constant dense<0.000000e+00> : vector<16x64xf32>
    %84 = tpu.matmul %47, %83, %cst_32 {dimension_numbers = #tpu.dot_dimension_numbers<[1], [0], [0], [1], [0, 0, 1, 1], [], []>} : vector<16x32xbf16>, vector<32x64xbf16>, vector<16x64xf32> -> vector<16x64xf32>
    %85 = arith.truncf %84 : vector<16x64xf32> to vector<16x64xbf16>
    %86 = vector.extract_strided_slice %77 {offsets = [0, 0], sizes = [8, 16], strides = [1, 1]} : vector<16x32xbf16> to vector<8x16xbf16>
    %87 = vector.extract_strided_slice %81 {offsets = [0, 0], sizes = [8, 16], strides = [1, 1]} : vector<16x64xbf16> to vector<8x16xbf16>
    %88 = vector.extract_strided_slice %85 {offsets = [0, 0], sizes = [8, 16], strides = [1, 1]} : vector<16x64xbf16> to vector<8x16xbf16>
    %89 = tpu.concatenate %87, %88 in 0 : vector<8x16xbf16>, vector<8x16xbf16> -> vector<16x16xbf16>
    %90 = vector.extract_strided_slice %81 {offsets = [0, 32], sizes = [8, 16], strides = [1, 1]} : vector<16x64xbf16> to vector<8x16xbf16>
    %91 = vector.extract_strided_slice %85 {offsets = [0, 32], sizes = [8, 16], strides = [1, 1]} : vector<16x64xbf16> to vector<8x16xbf16>
    %92 = tpu.concatenate %90, %91 in 0 : vector<8x16xbf16>, vector<8x16xbf16> -> vector<16x16xbf16>
    %cst_33 = arith.constant dense<0.000000e+00> : vector<8x16xf32>
    %93 = tpu.matmul %86, %89, %cst_33 {dimension_numbers = #tpu.dot_dimension_numbers<[1], [1], [0], [0], [0, 0, 1, 0], [], []>} : vector<8x16xbf16>, vector<16x16xbf16>, vector<8x16xf32> -> vector<8x16xf32>
    %94 = vector.extract_strided_slice %93 {offsets = [0, 0], sizes = [8, 8], strides = [1, 1]} : vector<8x16xf32> to vector<8x8xf32>
    %95 = vector.extract_strided_slice %93 {offsets = [0, 8], sizes = [8, 8], strides = [1, 1]} : vector<8x16xf32> to vector<8x8xf32>
    %cst_34 = arith.constant dense<0xFF800000> : vector<8xf32>
    %96 = vector.multi_reduction <maximumf>, %94, %cst_34 [1] : vector<8x8xf32> to vector<8xf32>
    %97 = vector.shape_cast %96 : vector<8xf32> to vector<8x1xf32>
    %98 = vector.broadcast %97 : vector<8x1xf32> to vector<8x8xf32>
    %99 = arith.subf %94, %98 : vector<8x8xf32>
    %100 = math.exp %99 : vector<8x8xf32>
    %cst_35 = arith.constant dense<0xFF800000> : vector<8xf32>
    %101 = vector.multi_reduction <maximumf>, %95, %cst_35 [1] : vector<8x8xf32> to vector<8xf32>
    %102 = vector.shape_cast %101 : vector<8xf32> to vector<8x1xf32>
    %103 = vector.broadcast %102 : vector<8x1xf32> to vector<8x8xf32>
    %104 = arith.subf %95, %103 : vector<8x8xf32>
    %105 = math.exp %104 : vector<8x8xf32>
    %cst_36 = arith.constant dense<0.000000e+00> : vector<8xf32>
    %106 = vector.multi_reduction <add>, %100, %cst_36 [1] : vector<8x8xf32> to vector<8xf32>
    %107 = vector.shape_cast %106 : vector<8xf32> to vector<8x1xf32>
    %108 = tpu.reciprocal %107 {approx = true} : vector<8x1xf32> -> vector<8x1xf32>
    %109 = vector.broadcast %108 : vector<8x1xf32> to vector<8x8xf32>
    %110 = arith.mulf %100, %109 : vector<8x8xf32>
    %cst_37 = arith.constant dense<0.000000e+00> : vector<8xf32>
    %111 = vector.multi_reduction <add>, %105, %cst_37 [1] : vector<8x8xf32> to vector<8xf32>
    %112 = vector.shape_cast %111 : vector<8xf32> to vector<8x1xf32>
    %113 = tpu.reciprocal %112 {approx = true} : vector<8x1xf32> -> vector<8x1xf32>
    %114 = vector.broadcast %113 : vector<8x1xf32> to vector<8x8xf32>
    %115 = arith.mulf %105, %114 : vector<8x8xf32>
    %116 = tpu.concatenate %110, %115 in 1 : vector<8x8xf32>, vector<8x8xf32> -> vector<8x16xf32>
    %117 = arith.truncf %116 : vector<8x16xf32> to vector<8x16xbf16>
    %cst_38 = arith.constant dense<0.000000e+00> : vector<8x16xf32>
    %118 = tpu.matmul %117, %92, %cst_38 {dimension_numbers = #tpu.dot_dimension_numbers<[1], [0], [0], [1], [0, 0, 1, 1], [], []>} : vector<8x16xbf16>, vector<16x16xbf16>, vector<8x16xf32> -> vector<8x16xf32>
    %119 = vector.extract_strided_slice %77 {offsets = [0, 16], sizes = [8, 16], strides = [1, 1]} : vector<16x32xbf16> to vector<8x16xbf16>
    %120 = vector.extract_strided_slice %81 {offsets = [0, 16], sizes = [8, 16], strides = [1, 1]} : vector<16x64xbf16> to vector<8x16xbf16>
    %121 = vector.extract_strided_slice %85 {offsets = [0, 16], sizes = [8, 16], strides = [1, 1]} : vector<16x64xbf16> to vector<8x16xbf16>
    %122 = tpu.concatenate %120, %121 in 0 : vector<8x16xbf16>, vector<8x16xbf16> -> vector<16x16xbf16>
    %123 = vector.extract_strided_slice %81 {offsets = [0, 48], sizes = [8, 16], strides = [1, 1]} : vector<16x64xbf16> to vector<8x16xbf16>
    %124 = vector.extract_strided_slice %85 {offsets = [0, 48], sizes = [8, 16], strides = [1, 1]} : vector<16x64xbf16> to vector<8x16xbf16>
    %125 = tpu.concatenate %123, %124 in 0 : vector<8x16xbf16>, vector<8x16xbf16> -> vector<16x16xbf16>
    %cst_39 = arith.constant dense<0.000000e+00> : vector<8x16xf32>
    %126 = tpu.matmul %119, %122, %cst_39 {dimension_numbers = #tpu.dot_dimension_numbers<[1], [1], [0], [0], [0, 0, 1, 0], [], []>} : vector<8x16xbf16>, vector<16x16xbf16>, vector<8x16xf32> -> vector<8x16xf32>
    %127 = vector.extract_strided_slice %126 {offsets = [0, 0], sizes = [8, 8], strides = [1, 1]} : vector<8x16xf32> to vector<8x8xf32>
    %128 = vector.extract_strided_slice %126 {offsets = [0, 8], sizes = [8, 8], strides = [1, 1]} : vector<8x16xf32> to vector<8x8xf32>
    %cst_40 = arith.constant dense<0xFF800000> : vector<8xf32>
    %129 = vector.multi_reduction <maximumf>, %127, %cst_40 [1] : vector<8x8xf32> to vector<8xf32>
    %130 = vector.shape_cast %129 : vector<8xf32> to vector<8x1xf32>
    %131 = vector.broadcast %130 : vector<8x1xf32> to vector<8x8xf32>
    %132 = arith.subf %127, %131 : vector<8x8xf32>
    %133 = math.exp %132 : vector<8x8xf32>
    %cst_41 = arith.constant dense<0xFF800000> : vector<8xf32>
    %134 = vector.multi_reduction <maximumf>, %128, %cst_41 [1] : vector<8x8xf32> to vector<8xf32>
    %135 = vector.shape_cast %134 : vector<8xf32> to vector<8x1xf32>
    %136 = vector.broadcast %135 : vector<8x1xf32> to vector<8x8xf32>
    %137 = arith.subf %128, %136 : vector<8x8xf32>
    %138 = math.exp %137 : vector<8x8xf32>
    %cst_42 = arith.constant dense<0.000000e+00> : vector<8xf32>
    %139 = vector.multi_reduction <add>, %133, %cst_42 [1] : vector<8x8xf32> to vector<8xf32>
    %140 = vector.shape_cast %139 : vector<8xf32> to vector<8x1xf32>
    %141 = tpu.reciprocal %140 {approx = true} : vector<8x1xf32> -> vector<8x1xf32>
    %142 = vector.broadcast %141 : vector<8x1xf32> to vector<8x8xf32>
    %143 = arith.mulf %133, %142 : vector<8x8xf32>
    %cst_43 = arith.constant dense<0.000000e+00> : vector<8xf32>
    %144 = vector.multi_reduction <add>, %138, %cst_43 [1] : vector<8x8xf32> to vector<8xf32>
    %145 = vector.shape_cast %144 : vector<8xf32> to vector<8x1xf32>
    %146 = tpu.reciprocal %145 {approx = true} : vector<8x1xf32> -> vector<8x1xf32>
    %147 = vector.broadcast %146 : vector<8x1xf32> to vector<8x8xf32>
    %148 = arith.mulf %138, %147 : vector<8x8xf32>
    %149 = tpu.concatenate %143, %148 in 1 : vector<8x8xf32>, vector<8x8xf32> -> vector<8x16xf32>
    %150 = arith.truncf %149 : vector<8x16xf32> to vector<8x16xbf16>
    %cst_44 = arith.constant dense<0.000000e+00> : vector<8x16xf32>
    %151 = tpu.matmul %150, %125, %cst_44 {dimension_numbers = #tpu.dot_dimension_numbers<[1], [0], [0], [1], [0, 0, 1, 1], [], []>} : vector<8x16xbf16>, vector<16x16xbf16>, vector<8x16xf32> -> vector<8x16xf32>
    %152 = tpu.concatenate %118, %151 in 1 : vector<8x16xf32>, vector<8x16xf32> -> vector<8x32xf32>
    %153 = vector.extract_strided_slice %77 {offsets = [8, 0], sizes = [8, 16], strides = [1, 1]} : vector<16x32xbf16> to vector<8x16xbf16>
    %154 = vector.extract_strided_slice %81 {offsets = [8, 0], sizes = [8, 16], strides = [1, 1]} : vector<16x64xbf16> to vector<8x16xbf16>
    %155 = vector.extract_strided_slice %85 {offsets = [8, 0], sizes = [8, 16], strides = [1, 1]} : vector<16x64xbf16> to vector<8x16xbf16>
    %156 = tpu.concatenate %154, %155 in 0 : vector<8x16xbf16>, vector<8x16xbf16> -> vector<16x16xbf16>
    %157 = vector.extract_strided_slice %81 {offsets = [8, 32], sizes = [8, 16], strides = [1, 1]} : vector<16x64xbf16> to vector<8x16xbf16>
    %158 = vector.extract_strided_slice %85 {offsets = [8, 32], sizes = [8, 16], strides = [1, 1]} : vector<16x64xbf16> to vector<8x16xbf16>
    %159 = tpu.concatenate %157, %158 in 0 : vector<8x16xbf16>, vector<8x16xbf16> -> vector<16x16xbf16>
    %cst_45 = arith.constant dense<0.000000e+00> : vector<8x16xf32>
    %160 = tpu.matmul %153, %156, %cst_45 {dimension_numbers = #tpu.dot_dimension_numbers<[1], [1], [0], [0], [0, 0, 1, 0], [], []>} : vector<8x16xbf16>, vector<16x16xbf16>, vector<8x16xf32> -> vector<8x16xf32>
    %161 = vector.extract_strided_slice %160 {offsets = [0, 0], sizes = [8, 8], strides = [1, 1]} : vector<8x16xf32> to vector<8x8xf32>
    %162 = vector.extract_strided_slice %160 {offsets = [0, 8], sizes = [8, 8], strides = [1, 1]} : vector<8x16xf32> to vector<8x8xf32>
    %cst_46 = arith.constant dense<0xFF800000> : vector<8xf32>
    %163 = vector.multi_reduction <maximumf>, %161, %cst_46 [1] : vector<8x8xf32> to vector<8xf32>
    %164 = vector.shape_cast %163 : vector<8xf32> to vector<8x1xf32>
    %165 = vector.broadcast %164 : vector<8x1xf32> to vector<8x8xf32>
    %166 = arith.subf %161, %165 : vector<8x8xf32>
    %167 = math.exp %166 : vector<8x8xf32>
    %cst_47 = arith.constant dense<0xFF800000> : vector<8xf32>
    %168 = vector.multi_reduction <maximumf>, %162, %cst_47 [1] : vector<8x8xf32> to vector<8xf32>
    %169 = vector.shape_cast %168 : vector<8xf32> to vector<8x1xf32>
    %170 = vector.broadcast %169 : vector<8x1xf32> to vector<8x8xf32>
    %171 = arith.subf %162, %170 : vector<8x8xf32>
    %172 = math.exp %171 : vector<8x8xf32>
    %cst_48 = arith.constant dense<0.000000e+00> : vector<8xf32>
    %173 = vector.multi_reduction <add>, %167, %cst_48 [1] : vector<8x8xf32> to vector<8xf32>
    %174 = vector.shape_cast %173 : vector<8xf32> to vector<8x1xf32>
    %175 = tpu.reciprocal %174 {approx = true} : vector<8x1xf32> -> vector<8x1xf32>
    %176 = vector.broadcast %175 : vector<8x1xf32> to vector<8x8xf32>
    %177 = arith.mulf %167, %176 : vector<8x8xf32>
    %cst_49 = arith.constant dense<0.000000e+00> : vector<8xf32>
    %178 = vector.multi_reduction <add>, %172, %cst_49 [1] : vector<8x8xf32> to vector<8xf32>
    %179 = vector.shape_cast %178 : vector<8xf32> to vector<8x1xf32>
    %180 = tpu.reciprocal %179 {approx = true} : vector<8x1xf32> -> vector<8x1xf32>
    %181 = vector.broadcast %180 : vector<8x1xf32> to vector<8x8xf32>
    %182 = arith.mulf %172, %181 : vector<8x8xf32>
    %183 = tpu.concatenate %177, %182 in 1 : vector<8x8xf32>, vector<8x8xf32> -> vector<8x16xf32>
    %184 = arith.truncf %183 : vector<8x16xf32> to vector<8x16xbf16>
    %cst_50 = arith.constant dense<0.000000e+00> : vector<8x16xf32>
    %185 = tpu.matmul %184, %159, %cst_50 {dimension_numbers = #tpu.dot_dimension_numbers<[1], [0], [0], [1], [0, 0, 1, 1], [], []>} : vector<8x16xbf16>, vector<16x16xbf16>, vector<8x16xf32> -> vector<8x16xf32>
    %186 = vector.extract_strided_slice %77 {offsets = [8, 16], sizes = [8, 16], strides = [1, 1]} : vector<16x32xbf16> to vector<8x16xbf16>
    %187 = vector.extract_strided_slice %81 {offsets = [8, 16], sizes = [8, 16], strides = [1, 1]} : vector<16x64xbf16> to vector<8x16xbf16>
    %188 = vector.extract_strided_slice %85 {offsets = [8, 16], sizes = [8, 16], strides = [1, 1]} : vector<16x64xbf16> to vector<8x16xbf16>
    %189 = tpu.concatenate %187, %188 in 0 : vector<8x16xbf16>, vector<8x16xbf16> -> vector<16x16xbf16>
    %190 = vector.extract_strided_slice %81 {offsets = [8, 48], sizes = [8, 16], strides = [1, 1]} : vector<16x64xbf16> to vector<8x16xbf16>
    %191 = vector.extract_strided_slice %85 {offsets = [8, 48], sizes = [8, 16], strides = [1, 1]} : vector<16x64xbf16> to vector<8x16xbf16>
    %192 = tpu.concatenate %190, %191 in 0 : vector<8x16xbf16>, vector<8x16xbf16> -> vector<16x16xbf16>
    %cst_51 = arith.constant dense<0.000000e+00> : vector<8x16xf32>
    %193 = tpu.matmul %186, %189, %cst_51 {dimension_numbers = #tpu.dot_dimension_numbers<[1], [1], [0], [0], [0, 0, 1, 0], [], []>} : vector<8x16xbf16>, vector<16x16xbf16>, vector<8x16xf32> -> vector<8x16xf32>
    %194 = vector.extract_strided_slice %193 {offsets = [0, 0], sizes = [8, 8], strides = [1, 1]} : vector<8x16xf32> to vector<8x8xf32>
    %195 = vector.extract_strided_slice %193 {offsets = [0, 8], sizes = [8, 8], strides = [1, 1]} : vector<8x16xf32> to vector<8x8xf32>
    %cst_52 = arith.constant dense<0xFF800000> : vector<8xf32>
    %196 = vector.multi_reduction <maximumf>, %194, %cst_52 [1] : vector<8x8xf32> to vector<8xf32>
    %197 = vector.shape_cast %196 : vector<8xf32> to vector<8x1xf32>
    %198 = vector.broadcast %197 : vector<8x1xf32> to vector<8x8xf32>
    %199 = arith.subf %194, %198 : vector<8x8xf32>
    %200 = math.exp %199 : vector<8x8xf32>
    %cst_53 = arith.constant dense<0xFF800000> : vector<8xf32>
    %201 = vector.multi_reduction <maximumf>, %195, %cst_53 [1] : vector<8x8xf32> to vector<8xf32>
    %202 = vector.shape_cast %201 : vector<8xf32> to vector<8x1xf32>
    %203 = vector.broadcast %202 : vector<8x1xf32> to vector<8x8xf32>
    %204 = arith.subf %195, %203 : vector<8x8xf32>
    %205 = math.exp %204 : vector<8x8xf32>
    %cst_54 = arith.constant dense<0.000000e+00> : vector<8xf32>
    %206 = vector.multi_reduction <add>, %200, %cst_54 [1] : vector<8x8xf32> to vector<8xf32>
    %207 = vector.shape_cast %206 : vector<8xf32> to vector<8x1xf32>
    %208 = tpu.reciprocal %207 {approx = true} : vector<8x1xf32> -> vector<8x1xf32>
    %209 = vector.broadcast %208 : vector<8x1xf32> to vector<8x8xf32>
    %210 = arith.mulf %200, %209 : vector<8x8xf32>
    %cst_55 = arith.constant dense<0.000000e+00> : vector<8xf32>
    %211 = vector.multi_reduction <add>, %205, %cst_55 [1] : vector<8x8xf32> to vector<8xf32>
    %212 = vector.shape_cast %211 : vector<8xf32> to vector<8x1xf32>
    %213 = tpu.reciprocal %212 {approx = true} : vector<8x1xf32> -> vector<8x1xf32>
    %214 = vector.broadcast %213 : vector<8x1xf32> to vector<8x8xf32>
    %215 = arith.mulf %205, %214 : vector<8x8xf32>
    %216 = tpu.concatenate %210, %215 in 1 : vector<8x8xf32>, vector<8x8xf32> -> vector<8x16xf32>
    %217 = arith.truncf %216 : vector<8x16xf32> to vector<8x16xbf16>
    %cst_56 = arith.constant dense<0.000000e+00> : vector<8x16xf32>
    %218 = tpu.matmul %217, %192, %cst_56 {dimension_numbers = #tpu.dot_dimension_numbers<[1], [0], [0], [1], [0, 0, 1, 1], [], []>} : vector<8x16xbf16>, vector<16x16xbf16>, vector<8x16xf32> -> vector<8x16xf32>
    %219 = tpu.concatenate %185, %218 in 1 : vector<8x16xf32>, vector<8x16xf32> -> vector<8x32xf32>
    %220 = tpu.concatenate %152, %219 in 0 : vector<8x32xf32>, vector<8x32xf32> -> vector<16x32xf32>
    %221 = arith.truncf %220 : vector<16x32xf32> to vector<16x32xbf16>
    %c0_57 = arith.constant 0 : index
    %c0_58 = arith.constant 0 : index
    %c0_59 = arith.constant 0 : index
    %222 = vector.load %arg10[%c0_57, %c0_58, %c0_59] : memref<1x32x32xbf16, #tpu.memory_space<vmem>>, vector<1x32x32xbf16>
    %223 = vector.shape_cast %222 : vector<1x32x32xbf16> to vector<32x32xbf16>
    %cst_60 = arith.constant dense<0.000000e+00> : vector<16x32xf32>
    %224 = tpu.matmul %221, %223, %cst_60 {dimension_numbers = #tpu.dot_dimension_numbers<[1], [0], [0], [1], [0, 0, 1, 1], [], []>} : vector<16x32xbf16>, vector<32x32xbf16>, vector<16x32xf32> -> vector<16x32xf32>
    %225 = vector.broadcast %73 : vector<1x32xf32> to vector<16x32xf32>
    %226 = arith.addf %224, %225 : vector<16x32xf32>
    %227 = arith.addf %72, %226 : vector<16x32xf32>
    %c0_61 = arith.constant 0 : index
    %c0_62 = arith.constant 0 : index
    %228 = vector.load %arg12[%c0_61, %c0_62] : memref<16x32xf32, #tpu.memory_space<vmem>>, vector<16x32xf32>
    tpu.vector_store %arg12[%c0_61, %c0_62], %227 {strides = array<i32>} : memref<16x32xf32, #tpu.memory_space<vmem>>, vector<16x32xf32>,
    %c1_i32 = arith.constant 1 : i32
    %229 = arith.cmpi eq, %arg1, %c1_i32 : i32
    %230 = arith.extui %229 : i1 to i32
    %c0_i32_63 = arith.constant 0 : i32
    %231 = arith.cmpi ne, %230, %c0_i32_63 : i32
    scf.if %231 {
      %c0_64 = arith.constant 0 : index
      %c0_65 = arith.constant 0 : index
      %232 = vector.load %arg11[%c0_64, %c0_65] : memref<16x32xf32, #tpu.memory_space<vmem>>, vector<16x32xf32>
      tpu.vector_store %arg11[%c0_64, %c0_65], %227 {strides = array<i32>} : memref<16x32xf32, #tpu.memory_space<vmem>>, vector<16x32xf32>,
    } else {
    }
    return
  }
  func.func @transform_0(%arg0: i32, %arg1: i32) -> (i32, i32, i32) {
    %c0_i32 = arith.constant 0 : i32
    %c0_i32_0 = arith.constant 0 : i32
    return %arg1, %arg0, %c0_i32 : i32, i32, i32
  }
  func.func @transform_1(%arg0: i32, %arg1: i32) -> (i32, i32) {
    %c0_i32 = arith.constant 0 : i32
    %c0_i32_0 = arith.constant 0 : i32
    return %arg0, %c0_i32 : i32, i32
  }
  func.func @transform_2(%arg0: i32, %arg1: i32) -> (i32, i32) {
    %c0_i32 = arith.constant 0 : i32
    %c0_i32_0 = arith.constant 0 : i32
    return %arg0, %c0_i32 : i32, i32
  }
  func.func @transform_3(%arg0: i32, %arg1: i32) -> (i32, i32) {
    %c0_i32 = arith.constant 0 : i32
    %c0_i32_0 = arith.constant 0 : i32
    return %arg0, %c0_i32 : i32, i32
  }
  func.func @transform_4(%arg0: i32, %arg1: i32) -> (i32, i32, i32) {
    %c0_i32 = arith.constant 0 : i32
    %c0_i32_0 = arith.constant 0 : i32
    %c0_i32_1 = arith.constant 0 : i32
    return %arg1, %c0_i32, %c0_i32_0 : i32, i32, i32
  }
  func.func @transform_5(%arg0: i32, %arg1: i32) -> (i32, i32, i32) {
    %c0_i32 = arith.constant 0 : i32
    %c0_i32_0 = arith.constant 0 : i32
    %c0_i32_1 = arith.constant 0 : i32
    return %arg1, %c0_i32, %c0_i32_0 : i32, i32, i32
  }
  func.func @transform_6(%arg0: i32, %arg1: i32) -> (i32, i32, i32) {
    %c0_i32 = arith.constant 0 : i32
    %c0_i32_0 = arith.constant 0 : i32
    %c0_i32_1 = arith.constant 0 : i32
    return %arg1, %c0_i32, %c0_i32_0 : i32, i32, i32
  }
  func.func @transform_7(%arg0: i32, %arg1: i32) -> (i32, i32, i32) {
    %c0_i32 = arith.constant 0 : i32
    %c0_i32_0 = arith.constant 0 : i32
    %c0_i32_1 = arith.constant 0 : i32
    return %arg1, %c0_i32, %c0_i32_0 : i32, i32, i32
  }
  func.func @transform_8(%arg0: i32, %arg1: i32) -> (i32, i32, i32) {
    %c0_i32 = arith.constant 0 : i32
    %c0_i32_0 = arith.constant 0 : i32
    %c0_i32_1 = arith.constant 0 : i32
    return %arg1, %c0_i32, %c0_i32_0 : i32, i32, i32
  }
  func.func @transform_9(%arg0: i32, %arg1: i32) -> (i32, i32) {
    %c0_i32 = arith.constant 0 : i32
    %c0_i32_0 = arith.constant 0 : i32
    return %arg0, %c0_i32 : i32, i32
  }
}

</mosaic_0001>

<llo_original>
// kernel: tpu_custom_call.1
$region0: #{tpu_custom_call.1}
  #allocation0 [shape = 'u32[]', space=smem, size = 0x4, offset = 0x4, fixed_abs, tag = 'smem constant byte address 0x4 - core index']
  #allocation1 [shape = 'u32[72,128]{1,0:T(1,128)}', space=vmem, size = 0x9000, scoped, tag = 'internal scratch']
  #allocation2 [shape = 'f32[16,32]{1,0:T(8,128)}', space=vmem, size = 0x2000, scoped, tag = 'scratch operand']
  #allocation3 [shape = 'f32[16,32]{1,0:T(8,128)}', space=vmem, size = 0x2000, scoped, tag = 'scratch operand']
  #allocation4 [shape = 'f32[16,32]{1,0:T(8,128)}', space=vmem, size = 0x2000, scoped, tag = 'scratch operand']
  %s0 = inlined_call_operand.vmem [shape: f32[2,16,32], index: 0, kind: input, shape index: {}]
  %s1 = inlined_call_operand.vmem [shape: f32[16,32], index: 1, kind: input, shape index: {}]
  %s2 = inlined_call_operand.hbm [shape: f32[16,32], index: 2, kind: input, shape index: {}]
  %s3 = inlined_call_operand.hbm [shape: f32[16,32], index: 3, kind: input, shape index: {}]
  %s4 = inlined_call_operand.vmem [shape: f32[2,9,32], index: 4, kind: input, shape index: {}]
  %s5 = inlined_call_operand.hbm [shape: bf16[2,32,32], index: 5, kind: input, shape index: {}]
  %s6 = inlined_call_operand.hbm [shape: bf16[2,32,64], index: 6, kind: input, shape index: {}]
  %s7 = inlined_call_operand.hbm [shape: bf16[2,32,64], index: 7, kind: input, shape index: {}]
  %s8 = inlined_call_operand.hbm [shape: bf16[2,32,32], index: 8, kind: input, shape index: {}]
  %s9 = inlined_call_operand.hbm [shape: f32[16,32], index: 9, kind: output, shape index: {}]
  %s10 = sld [smem:[#allocation0]]
  $region101: #{tpu_custom_call.1} parent=0
    _
  %s12 = ssub.s32 1, %s10
  %s13 = scalar_select 0, %s12, %s10
  $region1: #{tpu_custom_call.1} parent=0
    #allocation5 [shape = 'u8[8192]{0}', space=vmem, size = 0x2000, scoped, tag = 'input window, operand 2, single buffered']
    #allocation6 [shape = 's32[2]{0}', space=sflag, size = 0x8, scoped, tag = 'scoped memory for tpu_custom_call.1']
    #allocation7 [shape = 's32[2]{0}', space=sflag, size = 0x8, scoped, tag = 'scoped memory for tpu_custom_call.1']
    #allocation8 [shape = 'u8[8192]{0}', space=vmem, size = 0x2000, scoped, tag = 'input window, operand 3, single buffered']
    #allocation9 [shape = 's32[1]{0}', space=sflag, size = 0x4, scoped, tag = 'scoped memory for tpu_custom_call.1']
    #allocation10 [shape = 'u8[16384]{0}', space=vmem, size = 0x4000, scoped, tag = 'input window, operand 5']
    #allocation11 [shape = 'u8[16384]{0}', space=vmem, size = 0x4000, scoped, tag = 'input window, operand 6']
    #allocation12 [shape = 'u8[16384]{0}', space=vmem, size = 0x4000, scoped, tag = 'input window, operand 7']
    #allocation13 [shape = 'u8[16384]{0}', space=vmem, size = 0x4000, scoped, tag = 'input window, operand 8']
    #allocation14 [shape = 'u8[8192]{0}', space=vmem, size = 0x2000, scoped, tag = 'output window, operand 0, single buffered']
    %14 = vsyncpa [#allocation6], 0
    %15 = vsyncpa [#allocation9], 0
    %16 = vsyncpa [#allocation7], 0
    loop: start=0, step=1, limit=4
    $region2: #{tpu_custom_call.1} parent=1 // loop_pre_header
      _
    $region3: #{tpu_custom_call.1} parent=1 // loop_header
      %s18 = sphi 0, %s22
      %p19 = scmp.ge.s32.totalorder %s18, 4
      %s25 = sphi 0, %s37
      %s26 = sphi 0, %s33
      %s27 = sphi 0, %s25
      %s28 = sphi 0, %s26
      %s29 = sphi 0, %s27
      %s30 = sphi 0, %s28
      %s42 = sphi 0, %s44
      %s45 = sphi 0, %s42
      %s46 = sphi 0, %s45
      %s62 = sphi 0, %s46
      %s68 = sphi 0, %s70
      %s71 = sphi 0, %s68
      %s72 = sphi 0, %s71
      %s88 = sphi 0, %s72
      %s94 = sphi 0, %s96
      %s97 = sphi 0, %s94
      %s98 = sphi 0, %s97
      %s114 = sphi 0, %s98
      %s120 = sphi 0, %s122
      %s123 = sphi 0, %s120
      %s124 = sphi 0, %s123
      %s140 = sphi 0, %s124
      %s146 = sphi 0, %s148
      %s149 = sphi 0, %s146
      %s150 = sphi 0, %s149
      %s166 = sphi 0, %s150
      %s172 = sphi 0, %s174
      %s175 = sphi 0, %s172
      %s176 = sphi 0, %s175
      %s192 = sphi 0, %s176
      %s198 = sphi 0, %s200
      %s201 = sphi 0, %s198
      %s202 = sphi 0, %s201
      %s218 = sphi 0, %s202
      %s224 = sphi 0, %s226
      %s227 = sphi 0, %s224
      %s228 = sphi 0, %s227
      %s244 = sphi 0, %s228
      %s250 = sphi 0, %s252
      %s253 = sphi 0, %s250
      %s254 = sphi 0, %s253
      %s270 = sphi 0, %s254
      %s276 = sphi 0, %s278
      %s279 = sphi 0, %s276
      %s280 = sphi 0, %s279
      %s296 = sphi 0, %s280
    $region4: #{tpu_custom_call.1} parent=1 // loop_header_branch
      %21 = sbr.rel (%p19) target = $region8
    $region5: #{tpu_custom_call.1} parent=1 // loop_body
      %s23 = ssub.s32 %s18, 1
      %s24 = ssub.s32 %s18, 2
      %s31 = sadd.s32 1, %s26
      %p32 = scmp.ge.s32.totalorder %s31, 2
      %s33 = scalar_select %p32, 0, %s31
      %s34 = sadd.s32 1, %s25
      %s35 = scalar_select %p32, %s34, %s25
      %p36 = scmp.ge.s32.totalorder %s35, 1
      %s37 = scalar_select %p36, 0, %s35
      %s38 = ssub.s32 %s26, %s33
      %s39 = ssub.s32 %s25, %s37
      %s40 = sor.u32 %s38, %s39
      %p41 = scmp.eq.s32.totalorder %s40, 0
      %s43 = sadd.s32 %s42, 1
      %s44 = scalar_select %p41, %s42, %s43
      %p47 = pneg %p41
      %p48 = scmp.eq.s32.totalorder %s18, 1
      %p49 = por %p47, %p48
      %p50 = scmp.ne.s32.totalorder %s42, %s45
      %p51 = scmp.eq.s32.totalorder %s18, 0
      %p52 = por %p50, %p51
      %p53 = scmp.ne.s32.totalorder %s42, %s45
      %p54 = scmp.eq.s32.totalorder %s23, 1
      %p55 = por %p53, %p54
      %p56 = scmp.ne.s32.totalorder %s45, %s46
      %p57 = scmp.eq.s32.totalorder %s23, 0
      %p58 = por %p56, %p57
      %p59 = scmp.ne.s32.totalorder %s45, %s46
      %p60 = scmp.eq.s32.totalorder %s24, 1
      %p61 = por %p59, %p60
      %p63 = scmp.ne.s32.totalorder %s46, %s62
      %p64 = scmp.eq.s32.totalorder %s24, 0
      %p65 = por %p63, %p64
      %s66 = ssub.s32 %s25, %s37
      %p67 = scmp.eq.s32.totalorder %s66, 0
      %s69 = sadd.s32 %s68, 1
      %s70 = scalar_select %p67, %s68, %s69
      %p73 = pneg %p67
      %p74 = scmp.eq.s32.totalorder %s18, 1
      %p75 = por %p73, %p74
      %p76 = scmp.ne.s32.totalorder %s68, %s71
      %p77 = scmp.eq.s32.totalorder %s18, 0
      %p78 = por %p76, %p77
      %p79 = scmp.ne.s32.totalorder %s68, %s71
      %p80 = scmp.eq.s32.totalorder %s23, 1
      %p81 = por %p79, %p80
      %p82 = scmp.ne.s32.totalorder %s71, %s72
      %p83 = scmp.eq.s32.totalorder %s23, 0
      %p84 = por %p82, %p83
      %p85 = scmp.ne.s32.totalorder %s71, %s72
      %p86 = scmp.eq.s32.totalorder %s24, 1
      %p87 = por %p85, %p86
      %p89 = scmp.ne.s32.totalorder %s72, %s88
      %p90 = scmp.eq.s32.totalorder %s24, 0
      %p91 = por %p89, %p90
      %s92 = ssub.s32 %s25, %s37
      %p93 = scmp.eq.s32.totalorder %s92, 0
      %s95 = sadd.s32 %s94, 1
      %s96 = scalar_select %p93, %s94, %s95
      %p99 = pneg %p93
      %p100 = scmp.eq.s32.totalorder %s18, 1
      %p101 = por %p99, %p100
      %p102 = scmp.ne.s32.totalorder %s94, %s97
      %p103 = scmp.eq.s32.totalorder %s18, 0
      %p104 = por %p102, %p103
      %p105 = scmp.ne.s32.totalorder %s94, %s97
      %p106 = scmp.eq.s32.totalorder %s23, 1
      %p107 = por %p105, %p106
      %p108 = scmp.ne.s32.totalorder %s97, %s98
      %p109 = scmp.eq.s32.totalorder %s23, 0
      %p110 = por %p108, %p109
      %p111 = scmp.ne.s32.totalorder %s97, %s98
      %p112 = scmp.eq.s32.totalorder %s24, 1
      %p113 = por %p111, %p112
      %p115 = scmp.ne.s32.totalorder %s98, %s114
      %p116 = scmp.eq.s32.totalorder %s24, 0
      %p117 = por %p115, %p116
      %s118 = ssub.s32 %s25, %s37
      %p119 = scmp.eq.s32.totalorder %s118, 0
      %s121 = sadd.s32 %s120, 1
      %s122 = scalar_select %p119, %s120, %s121
      %p125 = pneg %p119
      %p126 = scmp.eq.s32.totalorder %s18, 1
      %p127 = por %p125, %p126
      %p128 = scmp.ne.s32.totalorder %s120, %s123
      %p129 = scmp.eq.s32.totalorder %s18, 0
      %p130 = por %p128, %p129
      %p131 = scmp.ne.s32.totalorder %s120, %s123
      %p132 = scmp.eq.s32.totalorder %s23, 1
      %p133 = por %p131, %p132
      %p134 = scmp.ne.s32.totalorder %s123, %s124
      %p135 = scmp.eq.s32.totalorder %s23, 0
      %p136 = por %p134, %p135
      %p137 = scmp.ne.s32.totalorder %s123, %s124
      %p138 = scmp.eq.s32.totalorder %s24, 1
      %p139 = por %p137, %p138
      %p141 = scmp.ne.s32.totalorder %s124, %s140
      %p142 = scmp.eq.s32.totalorder %s24, 0
      %p143 = por %p141, %p142
      %s144 = ssub.s32 %s26, %s33
      %p145 = scmp.eq.s32.totalorder %s144, 0
      %s147 = sadd.s32 %s146, 1
      %s148 = scalar_select %p145, %s146, %s147
      %p151 = pneg %p145
      %p152 = scmp.eq.s32.totalorder %s18, 1
      %p153 = por %p151, %p152
      %p154 = scmp.ne.s32.totalorder %s146, %s149
      %p155 = scmp.eq.s32.totalorder %s18, 0
      %p156 = por %p154, %p155
      %p157 = scmp.ne.s32.totalorder %s146, %s149
      %p158 = scmp.eq.s32.totalorder %s23, 1
      %p159 = por %p157, %p158
      %p160 = scmp.ne.s32.totalorder %s149, %s150
      %p161 = scmp.eq.s32.totalorder %s23, 0
      %p162 = por %p160, %p161
      %p163 = scmp.ne.s32.totalorder %s149, %s150
      %p164 = scmp.eq.s32.totalorder %s24, 1
      %p165 = por %p163, %p164
      %p167 = scmp.ne.s32.totalorder %s150, %s166
      %p168 = scmp.eq.s32.totalorder %s24, 0
      %p169 = por %p167, %p168
      %s170 = ssub.s32 %s26, %s33
      %p171 = scmp.eq.s32.totalorder %s170, 0
      %s173 = sadd.s32 %s172, 1
      %s174 = scalar_select %p171, %s172, %s173
      %p177 = pneg %p171
      %p178 = scmp.eq.s32.totalorder %s18, 1
      %p179 = por %p177, %p178
      %p180 = scmp.ne.s32.totalorder %s172, %s175
      %p181 = scmp.eq.s32.totalorder %s18, 0
      %p182 = por %p180, %p181
      %p183 = scmp.ne.s32.totalorder %s172, %s175
      %p184 = scmp.eq.s32.totalorder %s23, 1
      %p185 = por %p183, %p184
      %p186 = scmp.ne.s32.totalorder %s175, %s176
      %p187 = scmp.eq.s32.totalorder %s23, 0
      %p188 = por %p186, %p187
      %p189 = scmp.ne.s32.totalorder %s175, %s176
      %p190 = scmp.eq.s32.totalorder %s24, 1
      %p191 = por %p189, %p190
      %p193 = scmp.ne.s32.totalorder %s176, %s192
      %p194 = scmp.eq.s32.totalorder %s24, 0
      %p195 = por %p193, %p194
      %s196 = ssub.s32 %s26, %s33
      %p197 = scmp.eq.s32.totalorder %s196, 0
      %s199 = sadd.s32 %s198, 1
      %s200 = scalar_select %p197, %s198, %s199
      %p203 = pneg %p197
      %p204 = scmp.eq.s32.totalorder %s18, 1
      %p205 = por %p203, %p204
      %p206 = scmp.ne.s32.totalorder %s198, %s201
      %p207 = scmp.eq.s32.totalorder %s18, 0
      %p208 = por %p206, %p207
      %p209 = scmp.ne.s32.totalorder %s198, %s201
      %p210 = scmp.eq.s32.totalorder %s23, 1
      %p211 = por %p209, %p210
      %p212 = scmp.ne.s32.totalorder %s201, %s202
      %p213 = scmp.eq.s32.totalorder %s23, 0
      %p214 = por %p212, %p213
      %p215 = scmp.ne.s32.totalorder %s201, %s202
      %p216 = scmp.eq.s32.totalorder %s24, 1
      %p217 = por %p215, %p216
      %p219 = scmp.ne.s32.totalorder %s202, %s218
      %p220 = scmp.eq.s32.totalorder %s24, 0
      %p221 = por %p219, %p220
      %s222 = ssub.s32 %s26, %s33
      %p223 = scmp.eq.s32.totalorder %s222, 0
      %s225 = sadd.s32 %s224, 1
      %s226 = scalar_select %p223, %s224, %s225
      %p229 = pneg %p223
      %p230 = scmp.eq.s32.totalorder %s18, 1
      %p231 = por %p229, %p230
      %p232 = scmp.ne.s32.totalorder %s224, %s227
      %p233 = scmp.eq.s32.totalorder %s18, 0
      %p234 = por %p232, %p233
      %p235 = scmp.ne.s32.totalorder %s224, %s227
      %p236 = scmp.eq.s32.totalorder %s23, 1
      %p237 = por %p235, %p236
      %p238 = scmp.ne.s32.totalorder %s227, %s228
      %p239 = scmp.eq.s32.totalorder %s23, 0
      %p240 = por %p238, %p239
      %p241 = scmp.ne.s32.totalorder %s227, %s228
      %p242 = scmp.eq.s32.totalorder %s24, 1
      %p243 = por %p241, %p242
      %p245 = scmp.ne.s32.totalorder %s228, %s244
      %p246 = scmp.eq.s32.totalorder %s24, 0
      %p247 = por %p245, %p246
      %s248 = ssub.s32 %s26, %s33
      %p249 = scmp.eq.s32.totalorder %s248, 0
      %s251 = sadd.s32 %s250, 1
      %s252 = scalar_select %p249, %s250, %s251
      %p255 = pneg %p249
      %p256 = scmp.eq.s32.totalorder %s18, 1
      %p257 = por %p255, %p256
      %p258 = scmp.ne.s32.totalorder %s250, %s253
      %p259 = scmp.eq.s32.totalorder %s18, 0
      %p260 = por %p258, %p259
      %p261 = scmp.ne.s32.totalorder %s250, %s253
      %p262 = scmp.eq.s32.totalorder %s23, 1
      %p263 = por %p261, %p262
      %p264 = scmp.ne.s32.totalorder %s253, %s254
      %p265 = scmp.eq.s32.totalorder %s23, 0
      %p266 = por %p264, %p265
      %p267 = scmp.ne.s32.totalorder %s253, %s254
      %p268 = scmp.eq.s32.totalorder %s24, 1
      %p269 = por %p267, %p268
      %p271 = scmp.ne.s32.totalorder %s254, %s270
      %p272 = scmp.eq.s32.totalorder %s24, 0
      %p273 = por %p271, %p272
      %s274 = ssub.s32 %s25, %s37
      %p275 = scmp.eq.s32.totalorder %s274, 0
      %s277 = sadd.s32 %s276, 1
      %s278 = scalar_select %p275, %s276, %s277
      %p281 = pneg %p275
      %p282 = scmp.eq.s32.totalorder %s18, 1
      %p283 = por %p281, %p282
      %p284 = scmp.ne.s32.totalorder %s276, %s279
      %p285 = scmp.eq.s32.totalorder %s18, 0
      %p286 = por %p284, %p285
      %p287 = scmp.ne.s32.totalorder %s276, %s279
      %p288 = scmp.eq.s32.totalorder %s23, 1
      %p289 = por %p287, %p288
      %p290 = scmp.ne.s32.totalorder %s279, %s280
      %p291 = scmp.eq.s32.totalorder %s23, 0
      %p292 = por %p290, %p291
      %p293 = scmp.ne.s32.totalorder %s279, %s280
      %p294 = scmp.eq.s32.totalorder %s24, 1
      %p295 = por %p293, %p294
      %p297 = scmp.ne.s32.totalorder %s280, %s296
      %p298 = scmp.eq.s32.totalorder %s24, 0
      %p299 = por %p297, %p298
      %p300 = scmp.le.s32.totalorder 1, %s18
      %p301 = scmp.lt.s32.totalorder %s18, 3
      %p302 = pnand %p300, %p301
      %p303 = pneg %p302
      // Predicated region
      $region9: #{tpu_custom_call.1} parent=5 // pred_check
        _
      $region10: #{tpu_custom_call.1} parent=5 // pred_check_branch
        %305 = sbr.rel (%p302) target = $region12
      $region11: #{tpu_custom_call.1} parent=5 // pred_region
        %s306 = ssub.s32 %s18, 1
        // Predicated region
        $region13: #{tpu_custom_call.1} parent=11 // pred_check
          %p307 = pneg %p84
        $region14: #{tpu_custom_call.1} parent=11 // pred_check_branch
          %309 = sbr.rel (%p307) target = $region16
        $region15: #{tpu_custom_call.1} parent=11 // pred_region
          %s310 = smul.u32 2, %s27
          %p311 = scmp.lt.s32.totalorder %s310, 1
          %s312 = scalar_select %p311, %s310, 1
          %s313 = smul.addr %s312, 8
          %s314 = scalar_lea.vmem %s1, %s313
          %s315 = smul.u32 2, %s27
        $region16: #{tpu_custom_call.1} parent=11 // pred_fallthru
          _
        // Predicated region
        $region17: #{tpu_custom_call.1} parent=11 // pred_check
          %p316 = pneg %p110
        $region18: #{tpu_custom_call.1} parent=11 // pred_check_branch
          %318 = sbr.rel (%p316) target = $region20
        $region19: #{tpu_custom_call.1} parent=11 // pred_region
          %s319 = smul.u32 2, %s27
          %321 = vsyncadd [#allocation6], 0
          %s322 = smul.addr %s319, 8
          %s323 = scalar_lea.hbm %s2, %s322
          %s324 = sshll.u32 %s323, 4
          %s325 = int_to_ptr.hbm [resolvable:$true] %s324
          %s326 = sshll.u32 [#allocation5], 4
          %s327 = int_to_ptr.vmem [resolvable:$true] %s326
          %332 = dma.hbm_to_vmem [thread:$0]  %s325, 256, %s327, [#allocation6], 128, 128, 8
        $region20: #{tpu_custom_call.1} parent=11 // pred_fallthru
          _
        // Predicated region
        $region21: #{tpu_custom_call.1} parent=11 // pred_check
          %p333 = pneg %p136
        $region22: #{tpu_custom_call.1} parent=11 // pred_check_branch
          %335 = sbr.rel (%p333) target = $region24
        $region23: #{tpu_custom_call.1} parent=11 // pred_region
          %s336 = smul.u32 2, %s27
          %338 = vsyncadd [#allocation9], 0
          %s339 = smul.addr %s336, 8
          %s340 = scalar_lea.hbm %s3, %s339
          %s341 = sshll.u32 %s340, 4
          %s342 = int_to_ptr.hbm [resolvable:$true] %s341
          %s343 = sshll.u32 [#allocation8], 4
          %s344 = int_to_ptr.vmem [resolvable:$true] %s343
          %349 = dma.hbm_to_vmem [thread:$0]  %s342, 256, %s344, [#allocation9], 128, 128, 8
        $region24: #{tpu_custom_call.1} parent=11 // pred_fallthru
          _
      $region12: #{tpu_custom_call.1} parent=5 // pred_fallthru
        _
      %p350 = scmp.lt.s32.totalorder %s18, 2
      // Predicated region
      $region25: #{tpu_custom_call.1} parent=5 // pred_check
        %p351 = pneg %p350
      $region26: #{tpu_custom_call.1} parent=5 // pred_check_branch
        %353 = sbr.rel (%p351) target = $region28
      $region27: #{tpu_custom_call.1} parent=5 // pred_region
        // Predicated region
        $region29: #{tpu_custom_call.1} parent=27 // pred_check
          %p354 = pneg %p52
        $region30: #{tpu_custom_call.1} parent=27 // pred_check_branch
          %356 = sbr.rel (%p354) target = $region32
        $region31: #{tpu_custom_call.1} parent=27 // pred_region
          %s357 = smul.u32 2, %s25
          %p358 = scmp.lt.s32.totalorder %s26, 1
          %s359 = scalar_select %p358, %s26, 1
          %p360 = scmp.lt.s32.totalorder %s357, 1
          %s361 = scalar_select %p360, %s357, 1
          %s362 = smul.addr %s359, 2
          %s363 = sadd.s32 %s361, %s362
          %s364 = smul.addr %s363, 8
          %s365 = scalar_lea.vmem %s0, %s364
          %s366 = smul.u32 2, %s25
        $region32: #{tpu_custom_call.1} parent=27 // pred_fallthru
          _
        // Predicated region
        $region33: #{tpu_custom_call.1} parent=27 // pred_check
          %p367 = pneg %p156
        $region34: #{tpu_custom_call.1} parent=27 // pred_check_branch
          %369 = sbr.rel (%p367) target = $region36
        $region35: #{tpu_custom_call.1} parent=27 // pred_region
          %p370 = scmp.lt.s32.totalorder %s26, 1
          %s371 = scalar_select %p370, %s26, 1
          %s372 = smul.addr %s371, 2
          %s373 = smul.addr %s372, 8
          %s374 = scalar_lea.vmem %s4, %s373
        $region36: #{tpu_custom_call.1} parent=27 // pred_fallthru
          _
        // Predicated region
        $region37: #{tpu_custom_call.1} parent=27 // pred_check
          %p375 = pneg %p182
        $region38: #{tpu_custom_call.1} parent=27 // pred_check_branch
          %377 = sbr.rel (%p375) target = $region40
        $region39: #{tpu_custom_call.1} parent=27 // pred_region
          %s378 = sand.u32 %s18, 1
          %s379 = scalar_lea.sflag [#allocation6], %s378
          %s380 = sand.u32 %s172, 1
          %s381 = smul.addr %s380, 16
          %s382 = scalar_lea.vmem [#allocation10], %s381
          %384 = vsyncadd %s379, 0
          %s385 = smul.addr %s26, 4
          %s386 = smul.addr %s385, 4
          %s387 = scalar_lea.hbm %s5, %s386
          %s388 = sshll.u32 %s387, 4
          %s389 = int_to_ptr.hbm [resolvable:$true] %s388
          %s390 = sshll.u32 %s382, 4
          %s391 = int_to_ptr.vmem [resolvable:$true] %s390
          %396 = dma.hbm_to_vmem [thread:$0]  %s389, 256, %s391, %s379, 64, 64, 4
        $region40: #{tpu_custom_call.1} parent=27 // pred_fallthru
          _
        // Predicated region
        $region41: #{tpu_custom_call.1} parent=27 // pred_check
          %p397 = pneg %p208
        $region42: #{tpu_custom_call.1} parent=27 // pred_check_branch
          %399 = sbr.rel (%p397) target = $region44
        $region43: #{tpu_custom_call.1} parent=27 // pred_region
          %s400 = sand.u32 %s18, 1
          %s401 = scalar_lea.sflag [#allocation6], %s400
          %s402 = sand.u32 %s198, 1
          %s403 = smul.addr %s402, 16
          %s404 = scalar_lea.vmem [#allocation11], %s403
          %406 = vsyncadd %s401, 0
          %s407 = smul.addr %s26, 4
          %s408 = smul.addr %s407, 4
          %s409 = scalar_lea.hbm %s6, %s408
          %s410 = sshll.u32 %s409, 4
          %s411 = int_to_ptr.hbm [resolvable:$true] %s410
          %s412 = sshll.u32 %s404, 4
          %s413 = int_to_ptr.vmem [resolvable:$true] %s412
          %418 = dma.hbm_to_vmem [thread:$0]  %s411, 256, %s413, %s401, 64, 64, 4
        $region44: #{tpu_custom_call.1} parent=27 // pred_fallthru
          _
        // Predicated region
        $region45: #{tpu_custom_call.1} parent=27 // pred_check
          %p419 = pneg %p234
        $region46: #{tpu_custom_call.1} parent=27 // pred_check_branch
          %421 = sbr.rel (%p419) target = $region48
        $region47: #{tpu_custom_call.1} parent=27 // pred_region
          %s422 = sand.u32 %s18, 1
          %s423 = scalar_lea.sflag [#allocation6], %s422
          %s424 = sand.u32 %s224, 1
          %s425 = smul.addr %s424, 16
          %s426 = scalar_lea.vmem [#allocation12], %s425
          %428 = vsyncadd %s423, 0
          %s429 = smul.addr %s26, 4
          %s430 = smul.addr %s429, 4
          %s431 = scalar_lea.hbm %s7, %s430
          %s432 = sshll.u32 %s431, 4
          %s433 = int_to_ptr.hbm [resolvable:$true] %s432
          %s434 = sshll.u32 %s426, 4
          %s435 = int_to_ptr.vmem [resolvable:$true] %s434
          %440 = dma.hbm_to_vmem [thread:$0]  %s433, 256, %s435, %s423, 64, 64, 4
        $region48: #{tpu_custom_call.1} parent=27 // pred_fallthru
          _
        // Predicated region
        $region49: #{tpu_custom_call.1} parent=27 // pred_check
          %p441 = pneg %p260
        $region50: #{tpu_custom_call.1} parent=27 // pred_check_branch
          %443 = sbr.rel (%p441) target = $region52
        $region51: #{tpu_custom_call.1} parent=27 // pred_region
          %s444 = sand.u32 %s18, 1
          %s445 = scalar_lea.sflag [#allocation6], %s444
          %s446 = sand.u32 %s250, 1
          %s447 = smul.addr %s446, 16
          %s448 = scalar_lea.vmem [#allocation13], %s447
          %450 = vsyncadd %s445, 0
          %s451 = smul.addr %s26, 4
          %s452 = smul.addr %s451, 4
          %s453 = scalar_lea.hbm %s8, %s452
          %s454 = sshll.u32 %s453, 4
          %s455 = int_to_ptr.hbm [resolvable:$true] %s454
          %s456 = sshll.u32 %s448, 4
          %s457 = int_to_ptr.vmem [resolvable:$true] %s456
          %462 = dma.hbm_to_vmem [thread:$0]  %s455, 256, %s457, %s445, 64, 64, 4
        $region52: #{tpu_custom_call.1} parent=27 // pred_fallthru
          _
      $region28: #{tpu_custom_call.1} parent=5 // pred_fallthru
        _
      %p463 = scmp.le.s32.totalorder 1, %s18
      %p464 = scmp.lt.s32.totalorder %s18, 3
      %p465 = pnand %p463, %p464
      %p466 = pneg %p465
      // Predicated region
      $region53: #{tpu_custom_call.1} parent=5 // pred_check
        _
      $region54: #{tpu_custom_call.1} parent=5 // pred_check_branch
        %468 = sbr.rel (%p465) target = $region56
      $region55: #{tpu_custom_call.1} parent=5 // pred_region
        %s469 = ssub.s32 %s18, 1
        // Predicated region
        $region57: #{tpu_custom_call.1} parent=55 // pred_check
          %p470 = pneg %p110
        $region58: #{tpu_custom_call.1} parent=55 // pred_check_branch
          %472 = sbr.rel (%p470) target = $region60
        $region59: #{tpu_custom_call.1} parent=55 // pred_region
          %474 = dma.done [#allocation6], 256
        $region60: #{tpu_custom_call.1} parent=55 // pred_fallthru
          _
        // Predicated region
        $region61: #{tpu_custom_call.1} parent=55 // pred_check
          %p475 = pneg %p136
        $region62: #{tpu_custom_call.1} parent=55 // pred_check_branch
          %477 = sbr.rel (%p475) target = $region64
        $region63: #{tpu_custom_call.1} parent=55 // pred_region
          %479 = dma.done [#allocation9], 256
        $region64: #{tpu_custom_call.1} parent=55 // pred_fallthru
          _
        %s480 = sand.u32 %s23, 1
        %s481 = scalar_lea.sflag [#allocation6], %s480
        %s482 = sand.u32 %s175, 1
        %s483 = smul.addr %s482, 16
        %s484 = scalar_lea.vmem [#allocation10], %s483
        // Predicated region
        $region65: #{tpu_custom_call.1} parent=55 // pred_check
          %p485 = pneg %p188
        $region66: #{tpu_custom_call.1} parent=55 // pred_check_branch
          %487 = sbr.rel (%p485) target = $region68
        $region67: #{tpu_custom_call.1} parent=55 // pred_region
          %489 = dma.done %s481, 256
        $region68: #{tpu_custom_call.1} parent=55 // pred_fallthru
          _
        %s490 = sand.u32 %s23, 1
        %s491 = scalar_lea.sflag [#allocation6], %s490
        %s492 = sand.u32 %s201, 1
        %s493 = smul.addr %s492, 16
        %s494 = scalar_lea.vmem [#allocation11], %s493
        // Predicated region
        $region69: #{tpu_custom_call.1} parent=55 // pred_check
          %p495 = pneg %p214
        $region70: #{tpu_custom_call.1} parent=55 // pred_check_branch
          %497 = sbr.rel (%p495) target = $region72
        $region71: #{tpu_custom_call.1} parent=55 // pred_region
          %499 = dma.done %s491, 256
        $region72: #{tpu_custom_call.1} parent=55 // pred_fallthru
          _
        %s500 = sand.u32 %s23, 1
        %s501 = scalar_lea.sflag [#allocation6], %s500
        %s502 = sand.u32 %s227, 1
        %s503 = smul.addr %s502, 16
        %s504 = scalar_lea.vmem [#allocation12], %s503
        // Predicated region
        $region73: #{tpu_custom_call.1} parent=55 // pred_check
          %p505 = pneg %p240
        $region74: #{tpu_custom_call.1} parent=55 // pred_check_branch
          %507 = sbr.rel (%p505) target = $region76
        $region75: #{tpu_custom_call.1} parent=55 // pred_region
          %509 = dma.done %s501, 256
        $region76: #{tpu_custom_call.1} parent=55 // pred_fallthru
          _
        %s510 = sand.u32 %s23, 1
        %s511 = scalar_lea.sflag [#allocation6], %s510
        %s512 = sand.u32 %s253, 1
        %s513 = smul.addr %s512, 16
        %s514 = scalar_lea.vmem [#allocation13], %s513
        // Predicated region
        $region77: #{tpu_custom_call.1} parent=55 // pred_check
          %p515 = pneg %p266
        $region78: #{tpu_custom_call.1} parent=55 // pred_check_branch
          %517 = sbr.rel (%p515) target = $region80
        $region79: #{tpu_custom_call.1} parent=55 // pred_region
          %519 = dma.done %s511, 256
        $region80: #{tpu_custom_call.1} parent=55 // pred_fallthru
          _
        %s520 = smul.u32 2, %s27
        %p521 = scmp.lt.s32.totalorder %s28, 1
        %s522 = scalar_select %p521, %s28, 1
        %p523 = scmp.lt.s32.totalorder %s520, 1
        %s524 = scalar_select %p523, %s520, 1
        %s525 = smul.addr %s522, 2
        %s526 = sadd.s32 %s524, %s525
        %s527 = smul.addr %s526, 8
        %s528 = scalar_lea.vmem %s0, %s527
        %p529 = pneg %p58
        %p530 = pneg %p55
        %s531 = smul.u32 2, %s27
        %p532 = scmp.lt.s32.totalorder %s531, 1
        %s533 = scalar_select %p532, %s531, 1
        %s534 = smul.addr %s533, 8
        %s535 = scalar_lea.vmem %s1, %s534
        %p536 = pneg %p84
        %p537 = pneg %p81
        %p538 = pneg %p110
        %p539 = pneg %p107
        %p540 = pneg %p136
        %p541 = pneg %p133
        %p542 = scmp.lt.s32.totalorder %s28, 1
        %s543 = scalar_select %p542, %s28, 1
        %s544 = smul.addr %s543, 2
        %s545 = smul.addr %s544, 8
        %s546 = scalar_lea.vmem %s4, %s545
        %p547 = pneg %p162
        %p548 = pneg %p159
        %s549 = sand.u32 %s23, 1
        %s550 = scalar_lea.sflag [#allocation6], %s549
        %s551 = sand.u32 %s175, 1
        %s552 = smul.addr %s551, 16
        %s553 = scalar_lea.vmem [#allocation10], %s552
        %p554 = pneg %p188
        %p555 = pneg %p185
        %s556 = sand.u32 %s23, 1
        %s557 = scalar_lea.sflag [#allocation6], %s556
        %s558 = sand.u32 %s201, 1
        %s559 = smul.addr %s558, 16
        %s560 = scalar_lea.vmem [#allocation11], %s559
        %p561 = pneg %p214
        %p562 = pneg %p211
        %s563 = sand.u32 %s23, 1
        %s564 = scalar_lea.sflag [#allocation6], %s563
        %s565 = sand.u32 %s227, 1
        %s566 = smul.addr %s565, 16
        %s567 = scalar_lea.vmem [#allocation12], %s566
        %p568 = pneg %p240
        %p569 = pneg %p237
        %s570 = sand.u32 %s23, 1
        %s571 = scalar_lea.sflag [#allocation6], %s570
        %s572 = sand.u32 %s253, 1
        %s573 = smul.addr %s572, 16
        %s574 = scalar_lea.vmem [#allocation13], %s573
        %p575 = pneg %p266
        %p576 = pneg %p263
        %p577 = pneg %p292
        %p578 = pneg %p289
        %s579 = smul.u32 2, %s27
        %p580 = scmp.lt.s32.totalorder %s28, 1
        %s581 = scalar_select %p580, %s28, 1
        %p582 = scmp.lt.s32.totalorder %s579, 1
        %s583 = scalar_select %p582, %s579, 1
        %s584 = smul.addr %s581, 2
        %s585 = sadd.s32 %s583, %s584
        %s586 = smul.addr %s585, 8
        %s587 = scalar_lea.vmem %s0, %s586
        %s588 = smul.u32 2, %s27
        %s589 = smul.u32 2, %s27
        %p590 = scmp.lt.s32.totalorder %s589, 1
        %s591 = scalar_select %p590, %s589, 1
        %s592 = smul.addr %s591, 8
        %s593 = scalar_lea.vmem %s1, %s592
        %s594 = smul.u32 2, %s27
        %s595 = smul.u32 2, %s27
        %s596 = smul.u32 2, %s27
        %p597 = scmp.lt.s32.totalorder %s28, 1
        %s598 = scalar_select %p597, %s28, 1
        %s599 = smul.addr %s598, 2
        %s600 = smul.addr %s599, 8
        %s601 = scalar_lea.vmem %s4, %s600
        %s602 = smul.u32 2, %s27
        %p604 = scmp.eq.s32.totalorder %s28, 0
        // Predicated region
        $region81: #{tpu_custom_call.1} parent=55 // pred_check
          %p605 = pneg %p604
        $region82: #{tpu_custom_call.1} parent=55 // pred_check_branch
          %607 = sbr.rel (%p605) target = $region84
        $region83: #{tpu_custom_call.1} parent=55 // pred_region
          %v608 = vld [vmem:[#allocation8] sm:$0xff]
          %v609 = vld [vmem:[#allocation8 + $0x8] sm:$0xff]
          %vm610 = vcmask 261120
          %611 = vst.msk [vmem:[#allocation2] sm:$0xff] %vm610, %v608
          %612 = vst.msk [vmem:[#allocation2 + $0x8] sm:$0xff] %vm610, %v609
          %v613 = vld [vmem:[%s593] sm:$0xff]
          %v614 = vld [vmem:[%s593 + $0x8] sm:$0xff]
          %v615 = vsel %vm610, %v613, 0.0
          %616 = vadd.xlane.f32.xlu0 %v615
          %v617 = vpop.xlane.xlu0 %616
          %v618 = vsel %vm610, %v614, 0.0
          %619 = vadd.xlane.f32.xlu0 %v618
          %v620 = vpop.xlane.xlu0 %619
          %v621 = vrcp.pop 32.0
          %v622 = vmul.f32 32.0, %v621
          %v623 = vsub.f32 1.0, %v622
          %v624 = vmul.f32 %v621, %v623
          %v625 = vadd.f32 %v621, %v624
          %vm626 = vweird.f32 %v621
          %v627 = vsel %vm626, %v621, %v625
          %v628 = vmul.f32 %v617, %v627
          %v629 = vmul.f32 %v620, %v627
          %v630 = vsub.f32 %v613, %v628
          %v631 = vsub.f32 %v614, %v629
          %v632 = vmul.f32 %v630, %v630
          %v633 = vmul.f32 %v631, %v631
          %v634 = vsel %vm610, %v632, 0.0
          %635 = vadd.xlane.f32.xlu0 %v634
          %v636 = vpop.xlane.xlu0 %635
          %v637 = vsel %vm610, %v633, 0.0
          %638 = vadd.xlane.f32.xlu0 %v637
          %v639 = vpop.xlane.xlu0 %638
          %v640 = vmul.f32 %v636, %v627
          %v641 = vmul.f32 %v639, %v627
          %v642 = vadd.f32 %v640, 1e-05
          %v643 = vadd.f32 %v641, 1e-05
          %v644 = vrsqrt.pop %v642
          %v645 = vmul.f32 %v644, %v642
          %v646 = vmul.f32 %v645, %v644
          %v647 = vmul.f32 0.5, %v646
          %v648 = vsub.f32 1.5, %v647
          %v649 = vmul.f32 %v644, %v648
          %vm650 = vweird.f32 %v642
          %vm651 = vweird.f32 %v644
          %vm652 = vmor %vm650, %vm651
          %v653 = vsel %vm652, %v644, %v649
          %v654 = vrsqrt.pop %v643
          %v655 = vmul.f32 %v654, %v643
          %v656 = vmul.f32 %v655, %v654
          %v657 = vmul.f32 0.5, %v656
          %v658 = vsub.f32 1.5, %v657
          %v659 = vmul.f32 %v654, %v658
          %vm660 = vweird.f32 %v643
          %vm661 = vweird.f32 %v654
          %vm662 = vmor %vm660, %vm661
          %v663 = vsel %vm662, %v654, %v659
          %v664 = vmul.f32 %v630, %v653
          %v665 = vmul.f32 %v631, %v663
          %666 = vst.msk [vmem:[#allocation3] sm:$0xff] %vm610, %v664
          %667 = vst.msk [vmem:[#allocation3 + $0x8] sm:$0xff] %vm610, %v665
          %v668 = vld [vmem:[#allocation5] sm:$0xff]
          %v669 = vld [vmem:[#allocation5 + $0x8] sm:$0xff]
          %v670 = vsel %vm610, %v668, 0.0
          %671 = vadd.xlane.f32.xlu0 %v670
          %v672 = vpop.xlane.xlu0 %671
          %v673 = vsel %vm610, %v669, 0.0
          %674 = vadd.xlane.f32.xlu0 %v673
          %v675 = vpop.xlane.xlu0 %674
          %v676 = vmul.f32 %v672, %v627
          %v677 = vmul.f32 %v675, %v627
          %v678 = vsub.f32 %v668, %v676
          %v679 = vsub.f32 %v669, %v677
          %v680 = vmul.f32 %v678, %v678
          %v681 = vmul.f32 %v679, %v679
          %v682 = vsel %vm610, %v680, 0.0
          %683 = vadd.xlane.f32.xlu0 %v682
          %v684 = vpop.xlane.xlu0 %683
          %v685 = vsel %vm610, %v681, 0.0
          %686 = vadd.xlane.f32.xlu0 %v685
          %v687 = vpop.xlane.xlu0 %686
          %v688 = vmul.f32 %v684, %v627
          %v689 = vmul.f32 %v687, %v627
          %v690 = vadd.f32 %v688, 1e-05
          %v691 = vadd.f32 %v689, 1e-05
          %v692 = vrsqrt.pop %v690
          %v693 = vmul.f32 %v692, %v690
          %v694 = vmul.f32 %v693, %v692
          %v695 = vmul.f32 0.5, %v694
          %v696 = vsub.f32 1.5, %v695
          %v697 = vmul.f32 %v692, %v696
          %vm698 = vweird.f32 %v690
          %vm699 = vweird.f32 %v692
          %vm700 = vmor %vm698, %vm699
          %v701 = vsel %vm700, %v692, %v697
          %v702 = vrsqrt.pop %v691
          %v703 = vmul.f32 %v702, %v691
          %v704 = vmul.f32 %v703, %v702
          %v705 = vmul.f32 0.5, %v704
          %v706 = vsub.f32 1.5, %v705
          %v707 = vmul.f32 %v702, %v706
          %vm708 = vweird.f32 %v691
          %vm709 = vweird.f32 %v702
          %vm710 = vmor %vm708, %vm709
          %v711 = vsel %vm710, %v702, %v707
          %v712 = vmul.f32 %v678, %v701
          %v713 = vmul.f32 %v679, %v711
          %714 = vst.msk [vmem:[#allocation4] sm:$0xff] %vm610, %v712
          %715 = vst.msk [vmem:[#allocation4 + $0x8] sm:$0xff] %vm610, %v713
        $region84: #{tpu_custom_call.1} parent=55 // pred_fallthru
          _
        %v716 = vld [vmem:[%s601] sm:$0xff]
        %v717 = vld [vmem:[%s601 + $0x8] sm:$0x1]
        %v718 = vld [vmem:[%s587] sm:$0xff]
        %v719 = vld [vmem:[%s587 + $0x8] sm:$0xff]
        %vm720 = vcmask 261120
        %v721 = vsel %vm720, %v718, 0.0
        %722 = vadd.xlane.f32.xlu0 %v721
        %v723 = vpop.xlane.xlu0 %722
        %v724 = vsel %vm720, %v719, 0.0
        %725 = vadd.xlane.f32.xlu0 %v724
        %v726 = vpop.xlane.xlu0 %725
        %v727 = vrcp.pop 32.0
        %v728 = vmul.f32 32.0, %v727
        %v729 = vsub.f32 1.0, %v728
        %v730 = vmul.f32 %v727, %v729
        %v731 = vadd.f32 %v727, %v730
        %vm732 = vweird.f32 %v727
        %v733 = vsel %vm732, %v727, %v731
        %v734 = vmul.f32 %v723, %v733
        %v735 = vmul.f32 %v726, %v733
        %v736 = vsub.f32 %v718, %v734
        %v737 = vsub.f32 %v719, %v735
        %v738 = vmul.f32 %v736, %v736
        %v739 = vmul.f32 %v737, %v737
        %v740 = vsel %vm720, %v738, 0.0
        %741 = vadd.xlane.f32.xlu0 %v740
        %v742 = vpop.xlane.xlu0 %741
        %v743 = vsel %vm720, %v739, 0.0
        %744 = vadd.xlane.f32.xlu0 %v743
        %v745 = vpop.xlane.xlu0 %744
        %v746 = vmul.f32 %v742, %v733
        %v747 = vmul.f32 %v745, %v733
        %v748 = vadd.f32 %v746, 1e-05
        %v749 = vadd.f32 %v747, 1e-05
        %v750 = vrsqrt.pop %v748
        %v751 = vmul.f32 %v750, %v748
        %v752 = vmul.f32 %v751, %v750
        %v753 = vmul.f32 0.5, %v752
        %v754 = vsub.f32 1.5, %v753
        %v755 = vmul.f32 %v750, %v754
        %vm756 = vweird.f32 %v748
        %vm757 = vweird.f32 %v750
        %vm758 = vmor %vm756, %vm757
        %v759 = vsel %vm758, %v750, %v755
        %v760 = vrsqrt.pop %v749
        %v761 = vmul.f32 %v760, %v749
        %v762 = vmul.f32 %v761, %v760
        %v763 = vmul.f32 0.5, %v762
        %v764 = vsub.f32 1.5, %v763
        %v765 = vmul.f32 %v760, %v764
        %vm766 = vweird.f32 %v749
        %vm767 = vweird.f32 %v760
        %vm768 = vmor %vm766, %vm767
        %v769 = vsel %vm768, %v760, %v765
        %v770 = vmul.f32 %v736, %v759
        %v771 = vmul.f32 %v737, %v769
        %v772 = vperm.slane %v716, 0
        %v773 = vmul.f32 %v770, %v772
        %v774 = vmul.f32 %v771, %v772
        %v775 = vperm.slane %v716, 1
        %v776 = vadd.f32 %v773, %v775
        %v777 = vadd.f32 %v774, %v775
        %v778 = vpack.c.bf16 %v777, %v776
        %v779 = vld [vmem:[#allocation3] sm:$0xff]
        %v780 = vld [vmem:[#allocation3 + $0x8] sm:$0xff]
        %v781 = vperm.slane %v716, 2
        %v782 = vmul.f32 %v779, %v781
        %v783 = vmul.f32 %v780, %v781
        %v784 = vperm.slane %v716, 3
        %v785 = vadd.f32 %v782, %v784
        %v786 = vadd.f32 %v783, %v784
        %v787 = vpack.c.bf16 %v786, %v785
        %v788 = vld [vmem:[#allocation4] sm:$0xff]
        %v789 = vld [vmem:[#allocation4 + $0x8] sm:$0xff]
        %v790 = vperm.slane %v716, 4
        %v791 = vmul.f32 %v788, %v790
        %v792 = vmul.f32 %v789, %v790
        %v793 = vperm.slane %v716, 5
        %v794 = vadd.f32 %v791, %v793
        %v795 = vadd.f32 %v792, %v793
        %v796 = vpack.c.bf16 %v795, %v794
        %v797 = vld [vmem:[#allocation2] sm:$0xff]
        %v798 = vld [vmem:[#allocation2 + $0x8] sm:$0xff]
        %v799 = vsel %vm720, %v797, 0.0
        %800 = vadd.xlane.f32.xlu0 %v799
        %v801 = vpop.xlane.xlu0 %800
        %v802 = vsel %vm720, %v798, 0.0
        %803 = vadd.xlane.f32.xlu0 %v802
        %v804 = vpop.xlane.xlu0 %803
        %v805 = vmul.f32 %v801, %v733
        %v806 = vmul.f32 %v804, %v733
        %v807 = vsub.f32 %v797, %v805
        %v808 = vsub.f32 %v798, %v806
        %v809 = vmul.f32 %v807, %v807
        %v810 = vmul.f32 %v808, %v808
        %v811 = vsel %vm720, %v809, 0.0
        %812 = vadd.xlane.f32.xlu0 %v811
        %v813 = vpop.xlane.xlu0 %812
        %v814 = vsel %vm720, %v810, 0.0
        %815 = vadd.xlane.f32.xlu0 %v814
        %v816 = vpop.xlane.xlu0 %815
        %v817 = vmul.f32 %v813, %v733
        %v818 = vmul.f32 %v816, %v733
        %v819 = vadd.f32 %v817, 1e-05
        %v820 = vadd.f32 %v818, 1e-05
        %v821 = vrsqrt.pop %v819
        %v822 = vmul.f32 %v821, %v819
        %v823 = vmul.f32 %v822, %v821
        %v824 = vmul.f32 0.5, %v823
        %v825 = vsub.f32 1.5, %v824
        %v826 = vmul.f32 %v821, %v825
        %vm827 = vweird.f32 %v819
        %vm828 = vweird.f32 %v821
        %vm829 = vmor %vm827, %vm828
        %v830 = vsel %vm829, %v821, %v826
        %v831 = vrsqrt.pop %v820
        %v832 = vmul.f32 %v831, %v820
        %v833 = vmul.f32 %v832, %v831
        %v834 = vmul.f32 0.5, %v833
        %v835 = vsub.f32 1.5, %v834
        %v836 = vmul.f32 %v831, %v835
        %vm837 = vweird.f32 %v820
        %vm838 = vweird.f32 %v831
        %vm839 = vmor %vm837, %vm838
        %v840 = vsel %vm839, %v831, %v836
        %v841 = vmul.f32 %v807, %v830
        %v842 = vmul.f32 %v808, %v840
        %v843 = vperm.slane %v716, 6
        %v844 = vmul.f32 %v841, %v843
        %v845 = vmul.f32 %v842, %v843
        %v846 = vperm.slane %v716, 7
        %v847 = vadd.f32 %v844, %v846
        %v848 = vadd.f32 %v845, %v846
        %v849 = vld [vmem:[%s484] sm:$0xf]
        %v850 = vld [vmem:[%s484 + $0x4] sm:$0xf]
        %v851 = vld [vmem:[%s484 + $0x8] sm:$0xf]
        %v852 = vld [vmem:[%s484 + $0xc] sm:$0xf]
        %v857 = vunpack.c.l.b16 %v849
        %v858 = vunpack.c.l.b16 %v850
        %v859 = vunpack.c.l.b16 %v851
        %v860 = vunpack.c.l.b16 %v852
        %v861 = vpack.c.b16 %v858, %v857
        %v862 = vpack.c.b16 %v860, %v859
        %v866 = vsel %vm720, %v778, 0
        %868 = vmatpush.bf16.msra.mxu0 0
        %869 = vmatpush.bf16.msra.mxu0 0
        %870 = vmatpush.bf16.msra.mxu0 0
        %871 = vmatpush.bf16.msra.mxu0 0
        %872 = vmatpush.bf16.msra.mxu0 0
        %873 = vmatpush.bf16.msra.mxu0 0
        %874 = vmatpush.bf16.msra.mxu0 %v862
        %875 = vmatpush.bf16.msra.mxu0 %v861
        %876 = vmatmul.bf16.gmra.mxu0 %v866
        %v877 = vpop.f32.mrf.mxu0
        %v878 = vadd.f32 0.0, %v877
        %v879 = vpop.f32.mrf.mxu0
        %v880 = vadd.f32 0.0, %v879
        %881 = vdwg.mxu0
        %v882 = vpack.c.bf16 %v878, %v878
        %v883 = vpack.c.bf16 %v880, %v880
        %v884 = vld [vmem:[%s494] sm:$0xf]
        %v885 = vld [vmem:[%s494 + $0x4] sm:$0xf]
        %v886 = vld [vmem:[%s494 + $0x8] sm:$0xf]
        %v887 = vld [vmem:[%s494 + $0xc] sm:$0xf]
        %v892 = vunpack.c.l.b16 %v884
        %v893 = vunpack.c.l.b16 %v885
        %v894 = vunpack.c.l.b16 %v886
        %v895 = vunpack.c.l.b16 %v887
        %v896 = vpack.c.b16 %v893, %v892
        %v897 = vpack.c.b16 %v895, %v894
        %v901 = vsel %vm720, %v787, 0
        %903 = vmatpush.bf16.msra.mxu0 0
        %904 = vmatpush.bf16.msra.mxu0 0
        %905 = vmatpush.bf16.msra.mxu0 0
        %906 = vmatpush.bf16.msra.mxu0 0
        %907 = vmatpush.bf16.msra.mxu0 0
        %908 = vmatpush.bf16.msra.mxu0 0
        %909 = vmatpush.bf16.msra.mxu0 %v897
        %910 = vmatpush.bf16.msra.mxu0 %v896
        %911 = vmatmul.bf16.gmra.mxu0 %v901
        %v912 = vpop.f32.mrf.mxu0
        %v913 = vadd.f32 0.0, %v912
        %v914 = vpop.f32.mrf.mxu0
        %v915 = vadd.f32 0.0, %v914
        %916 = vdwg.mxu0
        %v917 = vpack.c.bf16 %v913, %v913
        %v918 = vpack.c.bf16 %v915, %v915
        %v919 = vld [vmem:[%s504] sm:$0xf]
        %v920 = vld [vmem:[%s504 + $0x4] sm:$0xf]
        %v921 = vld [vmem:[%s504 + $0x8] sm:$0xf]
        %v922 = vld [vmem:[%s504 + $0xc] sm:$0xf]
        %v927 = vunpack.c.l.b16 %v919
        %v928 = vunpack.c.l.b16 %v920
        %v929 = vunpack.c.l.b16 %v921
        %v930 = vunpack.c.l.b16 %v922
        %v931 = vpack.c.b16 %v928, %v927
        %v932 = vpack.c.b16 %v930, %v929
        %v936 = vsel %vm720, %v796, 0
        %938 = vmatpush.bf16.msra.mxu0 0
        %939 = vmatpush.bf16.msra.mxu0 0
        %940 = vmatpush.bf16.msra.mxu0 0
        %941 = vmatpush.bf16.msra.mxu0 0
        %942 = vmatpush.bf16.msra.mxu0 0
        %943 = vmatpush.bf16.msra.mxu0 0
        %944 = vmatpush.bf16.msra.mxu0 %v932
        %945 = vmatpush.bf16.msra.mxu0 %v931
        %946 = vmatmul.bf16.gmra.mxu0 %v936
        %v947 = vpop.f32.mrf.mxu0
        %v948 = vadd.f32 0.0, %v947
        %v949 = vpop.f32.mrf.mxu0
        %v950 = vadd.f32 0.0, %v949
        %951 = vdwg.mxu0
        %v952 = vpack.c.bf16 %v948, %v948
        %v953 = vpack.c.bf16 %v950, %v950
        %v955 = vunpack.c.l.b16 %v952
        %v956 = vpack.c.b16 %v955, %v955
        %vm957 = vcmask 1043456
        %v960 = vsel %vm957, %v917, %v956
        %vm961 = vcmask 130048
        %v963 = vsel %vm961, %v882, 0
        %v965 = vsel %vm961, %v960, 0
        %967 = vmatpush.bf16.xpose.msra.mxu0 0
        %968 = vmatpush.bf16.xpose.msra.mxu0 0
        %969 = vmatpush.bf16.xpose.msra.mxu0 0
        %970 = vmatpush.bf16.xpose.msra.mxu0 0
        %971 = vmatpush.bf16.xpose.msra.mxu0 0
        %972 = vmatpush.bf16.xpose.msra.mxu0 0
        %973 = vmatpush.bf16.xpose.msra.mxu0 0
        %974 = vmatpush.bf16.xpose.msra.mxu0 %v965
        %975 = vmatmul.bf16.gmra.mxu0 %v963
        %v976 = vpop.f32.mrf.mxu0
        %v977 = vadd.f32 0.0, %v976
        %v978 = vpop.f32.mrf.mxu0
        %979 = vdwg.mxu0
        %vm980 = vcmask 64512
        %v981 = vsel %vm980, %v977, -inf
        %982 = vmax.xlane.f32.xlu0 %v981
        %v983 = vpop.xlane.xlu0 %982
        %v984 = vsub.f32 %v977, %v983
        %v985 = vmul.f32 %v984, 1.442695
        %v986 = vpow.pop %v985
        %vm987 = vcmask 130112
        %v988 = vsel %vm987, %v977, -inf
        %989 = vmax.xlane.f32.xlu0 %v988
        %v990 = vpop.xlane.xlu0 %989
        %v991 = vsub.f32 %v977, %v990
        %v992 = vmul.f32 %v991, 1.442695
        %v993 = vpow.pop %v992
        %v994 = vsel %vm980, %v986, 0.0
        %995 = vadd.xlane.f32.xlu0 %v994
        %v996 = vpop.xlane.xlu0 %995
        %v997 = vrcp.pop %v996
        %v998 = vmul.f32 %v986, %v997
        %1000 = vrot.lane.b32.xlu0 %v993, 120
        %v1001 = vpop.permute.xlu0 %1000
        %v1003 = vsel %vm980, %v1001, 0.0
        %1004 = vadd.xlane.f32.xlu0 %v1003
        %v1005 = vpop.xlane.xlu0 %1004
        %v1006 = vrcp.pop %v1005
        %v1007 = vmul.f32 %v993, %v1006
        %v1008 = vsel %vm980, %v998, %v1007
        %v1009 = vpack.c.bf16 %v1008, %v1008
        %1011 = vrot.lane.b32.xlu0 %v960, 96
        %v1012 = vpop.permute.xlu0 %1011
        %v1015 = vsel %vm961, %v1009, 0
        %1017 = vmatpush.bf16.msra.mxu0 0
        %1018 = vmatpush.bf16.msra.mxu0 0
        %1019 = vmatpush.bf16.msra.mxu0 0
        %1020 = vmatpush.bf16.msra.mxu0 0
        %1021 = vmatpush.bf16.msra.mxu0 0
        %1022 = vmatpush.bf16.msra.mxu0 0
        %1023 = vmatpush.bf16.msra.mxu0 0
        %1024 = vmatpush.bf16.msra.mxu0 %v1012
        %1025 = vmatmul.bf16.gmra.mxu0 %v1015
        %v1026 = vpop.f32.mrf.mxu0
        %v1027 = vadd.f32 0.0, %v1026
        %v1028 = vpop.f32.mrf.mxu0
        %1029 = vdwg.mxu0
        %v1031 = vunpack.c.l.b16 %v882
        %v1032 = vpack.c.b16 %v1031, %v1031
        %1033 = vrot.lane.b32.xlu0 %v1032, 112
        %v1034 = vpop.permute.xlu0 %1033
        %1035 = vrot.lane.b32.xlu0 %v960, 112
        %v1036 = vpop.permute.xlu0 %1035
        %v1038 = vsel %vm961, %v1034, 0
        %v1041 = vsel %vm961, %v1036, 0
        %1043 = vmatpush.bf16.xpose.msra.mxu0 0
        %1044 = vmatpush.bf16.xpose.msra.mxu0 0
        %1045 = vmatpush.bf16.xpose.msra.mxu0 0
        %1046 = vmatpush.bf16.xpose.msra.mxu0 0
        %1047 = vmatpush.bf16.xpose.msra.mxu0 0
        %1048 = vmatpush.bf16.xpose.msra.mxu0 0
        %1049 = vmatpush.bf16.xpose.msra.mxu0 0
        %1050 = vmatpush.bf16.xpose.msra.mxu0 %v1041
        %1051 = vmatmul.bf16.gmra.mxu0 %v1038
        %v1052 = vpop.f32.mrf.mxu0
        %v1053 = vadd.f32 0.0, %v1052
        %v1054 = vpop.f32.mrf.mxu0
        %1055 = vdwg.mxu0
        %v1056 = vsel %vm980, %v1053, -inf
        %1057 = vmax.xlane.f32.xlu0 %v1056
        %v1058 = vpop.xlane.xlu0 %1057
        %v1059 = vsub.f32 %v1053, %v1058
        %v1060 = vmul.f32 %v1059, 1.442695
        %v1061 = vpow.pop %v1060
        %v1062 = vsel %vm987, %v1053, -inf
        %1063 = vmax.xlane.f32.xlu0 %v1062
        %v1064 = vpop.xlane.xlu0 %1063
        %v1065 = vsub.f32 %v1053, %v1064
        %v1066 = vmul.f32 %v1065, 1.442695
        %v1067 = vpow.pop %v1066
        %v1068 = vsel %vm980, %v1061, 0.0
        %1069 = vadd.xlane.f32.xlu0 %v1068
        %v1070 = vpop.xlane.xlu0 %1069
        %v1071 = vrcp.pop %v1070
        %v1072 = vmul.f32 %v1061, %v1071
        %1074 = vrot.lane.b32.xlu0 %v1067, 120
        %v1075 = vpop.permute.xlu0 %1074
        %v1077 = vsel %vm980, %v1075, 0.0
        %1078 = vadd.xlane.f32.xlu0 %v1077
        %v1079 = vpop.xlane.xlu0 %1078
        %v1080 = vrcp.pop %v1079
        %v1081 = vmul.f32 %v1067, %v1080
        %v1082 = vsel %vm980, %v1072, %v1081
        %v1083 = vpack.c.bf16 %v1082, %v1082
        %1084 = vrot.lane.b32.xlu0 %v960, 80
        %v1085 = vpop.permute.xlu0 %1084
        %v1088 = vsel %vm961, %v1083, 0
        %1090 = vmatpush.bf16.msra.mxu0 0
        %1091 = vmatpush.bf16.msra.mxu0 0
        %1092 = vmatpush.bf16.msra.mxu0 0
        %1093 = vmatpush.bf16.msra.mxu0 0
        %1094 = vmatpush.bf16.msra.mxu0 0
        %1095 = vmatpush.bf16.msra.mxu0 0
        %1096 = vmatpush.bf16.msra.mxu0 0
        %1097 = vmatpush.bf16.msra.mxu0 %v1085
        %1098 = vmatmul.bf16.gmra.mxu0 %v1088
        %v1099 = vpop.f32.mrf.mxu0
        %v1100 = vadd.f32 0.0, %v1099
        %v1101 = vpop.f32.mrf.mxu0
        %1102 = vdwg.mxu0
        %1104 = vrot.lane.b32.xlu0 %v1100, 16
        %v1105 = vpop.permute.xlu0 %1104
        %v1107 = vsel %vm961, %v1027, %v1105
        %v1109 = vunpack.c.l.b16 %v953
        %v1110 = vpack.c.b16 %v1109, %v1109
        %v1113 = vsel %vm957, %v918, %v1110
        %v1115 = vsel %vm961, %v883, 0
        %v1117 = vsel %vm961, %v1113, 0
        %1119 = vmatpush.bf16.xpose.msra.mxu0 0
        %1120 = vmatpush.bf16.xpose.msra.mxu0 0
        %1121 = vmatpush.bf16.xpose.msra.mxu0 0
        %1122 = vmatpush.bf16.xpose.msra.mxu0 0
        %1123 = vmatpush.bf16.xpose.msra.mxu0 0
        %1124 = vmatpush.bf16.xpose.msra.mxu0 0
        %1125 = vmatpush.bf16.xpose.msra.mxu0 0
        %1126 = vmatpush.bf16.xpose.msra.mxu0 %v1117
        %1127 = vmatmul.bf16.gmra.mxu0 %v1115
        %v1128 = vpop.f32.mrf.mxu0
        %v1129 = vadd.f32 0.0, %v1128
        %v1130 = vpop.f32.mrf.mxu0
        %1131 = vdwg.mxu0
        %v1132 = vsel %vm980, %v1129, -inf
        %1133 = vmax.xlane.f32.xlu0 %v1132
        %v1134 = vpop.xlane.xlu0 %1133
        %v1135 = vsub.f32 %v1129, %v1134
        %v1136 = vmul.f32 %v1135, 1.442695
        %v1137 = vpow.pop %v1136
        %v1138 = vsel %vm987, %v1129, -inf
        %1139 = vmax.xlane.f32.xlu0 %v1138
        %v1140 = vpop.xlane.xlu0 %1139
        %v1141 = vsub.f32 %v1129, %v1140
        %v1142 = vmul.f32 %v1141, 1.442695
        %v1143 = vpow.pop %v1142
        %v1144 = vsel %vm980, %v1137, 0.0
        %1145 = vadd.xlane.f32.xlu0 %v1144
        %v1146 = vpop.xlane.xlu0 %1145
        %v1147 = vrcp.pop %v1146
        %v1148 = vmul.f32 %v1137, %v1147
        %1150 = vrot.lane.b32.xlu0 %v1143, 120
        %v1151 = vpop.permute.xlu0 %1150
        %v1153 = vsel %vm980, %v1151, 0.0
        %1154 = vadd.xlane.f32.xlu0 %v1153
        %v1155 = vpop.xlane.xlu0 %1154
        %v1156 = vrcp.pop %v1155
        %v1157 = vmul.f32 %v1143, %v1156
        %v1158 = vsel %vm980, %v1148, %v1157
        %v1159 = vpack.c.bf16 %v1158, %v1158
        %1161 = vrot.lane.b32.xlu0 %v1113, 96
        %v1162 = vpop.permute.xlu0 %1161
        %v1165 = vsel %vm961, %v1159, 0
        %1167 = vmatpush.bf16.msra.mxu0 0
        %1168 = vmatpush.bf16.msra.mxu0 0
        %1169 = vmatpush.bf16.msra.mxu0 0
        %1170 = vmatpush.bf16.msra.mxu0 0
        %1171 = vmatpush.bf16.msra.mxu0 0
        %1172 = vmatpush.bf16.msra.mxu0 0
        %1173 = vmatpush.bf16.msra.mxu0 0
        %1174 = vmatpush.bf16.msra.mxu0 %v1162
        %1175 = vmatmul.bf16.gmra.mxu0 %v1165
        %v1176 = vpop.f32.mrf.mxu0
        %v1177 = vadd.f32 0.0, %v1176
        %v1178 = vpop.f32.mrf.mxu0
        %1179 = vdwg.mxu0
        %v1181 = vunpack.c.l.b16 %v883
        %v1182 = vpack.c.b16 %v1181, %v1181
        %1183 = vrot.lane.b32.xlu0 %v1182, 112
        %v1184 = vpop.permute.xlu0 %1183
        %1185 = vrot.lane.b32.xlu0 %v1113, 112
        %v1186 = vpop.permute.xlu0 %1185
        %v1188 = vsel %vm961, %v1184, 0
        %v1191 = vsel %vm961, %v1186, 0
        %1193 = vmatpush.bf16.xpose.msra.mxu0 0
        %1194 = vmatpush.bf16.xpose.msra.mxu0 0
        %1195 = vmatpush.bf16.xpose.msra.mxu0 0
        %1196 = vmatpush.bf16.xpose.msra.mxu0 0
        %1197 = vmatpush.bf16.xpose.msra.mxu0 0
        %1198 = vmatpush.bf16.xpose.msra.mxu0 0
        %1199 = vmatpush.bf16.xpose.msra.mxu0 0
        %1200 = vmatpush.bf16.xpose.msra.mxu0 %v1191
        %1201 = vmatmul.bf16.gmra.mxu0 %v1188
        %v1202 = vpop.f32.mrf.mxu0
        %v1203 = vadd.f32 0.0, %v1202
        %v1204 = vpop.f32.mrf.mxu0
        %1205 = vdwg.mxu0
        %v1206 = vsel %vm980, %v1203, -inf
        %1207 = vmax.xlane.f32.xlu0 %v1206
        %v1208 = vpop.xlane.xlu0 %1207
        %v1209 = vsub.f32 %v1203, %v1208
        %v1210 = vmul.f32 %v1209, 1.442695
        %v1211 = vpow.pop %v1210
        %v1212 = vsel %vm987, %v1203, -inf
        %1213 = vmax.xlane.f32.xlu0 %v1212
        %v1214 = vpop.xlane.xlu0 %1213
        %v1215 = vsub.f32 %v1203, %v1214
        %v1216 = vmul.f32 %v1215, 1.442695
        %v1217 = vpow.pop %v1216
        %v1218 = vsel %vm980, %v1211, 0.0
        %1219 = vadd.xlane.f32.xlu0 %v1218
        %v1220 = vpop.xlane.xlu0 %1219
        %v1221 = vrcp.pop %v1220
        %v1222 = vmul.f32 %v1211, %v1221
        %1224 = vrot.lane.b32.xlu0 %v1217, 120
        %v1225 = vpop.permute.xlu0 %1224
        %v1227 = vsel %vm980, %v1225, 0.0
        %1228 = vadd.xlane.f32.xlu0 %v1227
        %v1229 = vpop.xlane.xlu0 %1228
        %v1230 = vrcp.pop %v1229
        %v1231 = vmul.f32 %v1217, %v1230
        %v1232 = vsel %vm980, %v1222, %v1231
        %v1233 = vpack.c.bf16 %v1232, %v1232
        %1234 = vrot.lane.b32.xlu0 %v1113, 80
        %v1235 = vpop.permute.xlu0 %1234
        %v1238 = vsel %vm961, %v1233, 0
        %1240 = vmatpush.bf16.msra.mxu0 0
        %1241 = vmatpush.bf16.msra.mxu0 0
        %1242 = vmatpush.bf16.msra.mxu0 0
        %1243 = vmatpush.bf16.msra.mxu0 0
        %1244 = vmatpush.bf16.msra.mxu0 0
        %1245 = vmatpush.bf16.msra.mxu0 0
        %1246 = vmatpush.bf16.msra.mxu0 0
        %1247 = vmatpush.bf16.msra.mxu0 %v1235
        %1248 = vmatmul.bf16.gmra.mxu0 %v1238
        %v1249 = vpop.f32.mrf.mxu0
        %v1250 = vadd.f32 0.0, %v1249
        %v1251 = vpop.f32.mrf.mxu0
        %1252 = vdwg.mxu0
        %1254 = vrot.lane.b32.xlu0 %v1250, 16
        %v1255 = vpop.permute.xlu0 %1254
        %v1257 = vsel %vm961, %v1177, %v1255
        %v1258 = vpack.c.bf16 %v1257, %v1107
        %v1259 = vld [vmem:[%s514] sm:$0xf]
        %v1260 = vld [vmem:[%s514 + $0x4] sm:$0xf]
        %v1261 = vld [vmem:[%s514 + $0x8] sm:$0xf]
        %v1262 = vld [vmem:[%s514 + $0xc] sm:$0xf]
        %v1263 = vperm.slane %v717, 0
        %v1268 = vunpack.c.l.b16 %v1259
        %v1269 = vunpack.c.l.b16 %v1260
        %v1270 = vunpack.c.l.b16 %v1261
        %v1271 = vunpack.c.l.b16 %v1262
        %v1272 = vpack.c.b16 %v1269, %v1268
        %v1273 = vpack.c.b16 %v1271, %v1270
        %v1277 = vsel %vm720, %v1258, 0
        %1279 = vmatpush.bf16.msra.mxu0 0
        %1280 = vmatpush.bf16.msra.mxu0 0
        %1281 = vmatpush.bf16.msra.mxu0 0
        %1282 = vmatpush.bf16.msra.mxu0 0
        %1283 = vmatpush.bf16.msra.mxu0 0
        %1284 = vmatpush.bf16.msra.mxu0 0
        %1285 = vmatpush.bf16.msra.mxu0 %v1273
        %1286 = vmatpush.bf16.msra.mxu0 %v1272
        %1287 = vmatmul.bf16.gmra.mxu0 %v1277
        %v1288 = vpop.f32.mrf.mxu0
        %v1289 = vadd.f32 %v1263, %v1288
        %v1290 = vpop.f32.mrf.mxu0
        %v1291 = vadd.f32 %v1263, %v1290
        %1292 = vdwg.mxu0
        %v1293 = vadd.f32 %v847, %v1289
        %v1294 = vadd.f32 %v848, %v1291
        %1295 = vst.msk [vmem:[#allocation2] sm:$0xff] %vm720, %v1293
        %1296 = vst.msk [vmem:[#allocation2 + $0x8] sm:$0xff] %vm720, %v1294
        %p1297 = scmp.eq.s32.totalorder %s28, 1
        // Predicated region
        $region85: #{tpu_custom_call.1} parent=55 // pred_check
          %p1298 = pneg %p1297
        $region86: #{tpu_custom_call.1} parent=55 // pred_check_branch
          %1300 = sbr.rel (%p1298) target = $region88
        $region87: #{tpu_custom_call.1} parent=55 // pred_region
          %1301 = vst.msk [vmem:[#allocation14] sm:$0xff] %vm720, %v1293
          %1302 = vst.msk [vmem:[#allocation14 + $0x8] sm:$0xff] %vm720, %v1294
        $region88: #{tpu_custom_call.1} parent=55 // pred_fallthru
          _
        // Predicated region
        $region89: #{tpu_custom_call.1} parent=55 // pred_check
          %p1303 = pneg %p289
        $region90: #{tpu_custom_call.1} parent=55 // pred_check_branch
          %1305 = sbr.rel (%p1303) target = $region92
        $region91: #{tpu_custom_call.1} parent=55 // pred_region
          %s1306 = smul.u32 2, %s27
          %1308 = vsyncadd [#allocation7], 0
          %s1309 = smul.addr %s1306, 8
          %s1310 = scalar_lea.hbm %s9, %s1309
          %s1311 = sshll.u32 [#allocation14], 4
          %s1312 = int_to_ptr.vmem [resolvable:$true] %s1311
          %s1313 = sshll.u32 %s1310, 4
          %s1314 = int_to_ptr.hbm [resolvable:$true] %s1313
          %1319 = dma.vmem_to_hbm [thread:$0]  %s1312, 256, %s1314, [#allocation7], 128, 128, 8
        $region92: #{tpu_custom_call.1} parent=55 // pred_fallthru
          _
        // Predicated region
        $region93: #{tpu_custom_call.1} parent=55 // pred_check
          %p1320 = pneg %p289
        $region94: #{tpu_custom_call.1} parent=55 // pred_check_branch
          %1322 = sbr.rel (%p1320) target = $region96
        $region95: #{tpu_custom_call.1} parent=55 // pred_region
          %1324 = dma.done [#allocation7], 256
        $region96: #{tpu_custom_call.1} parent=55 // pred_fallthru
          _
      $region56: #{tpu_custom_call.1} parent=5 // pred_fallthru
        _
      %p1325 = scmp.le.s32.totalorder 2, %s18
      // Predicated region
      $region97: #{tpu_custom_call.1} parent=5 // pred_check
        %p1326 = pneg %p1325
      $region98: #{tpu_custom_call.1} parent=5 // pred_check_branch
        %1328 = sbr.rel (%p1326) target = $region100
      $region99: #{tpu_custom_call.1} parent=5 // pred_region
        %s1329 = ssub.s32 %s18, 2
      $region100: #{tpu_custom_call.1} parent=5 // pred_fallthru
        _
    $region6: #{tpu_custom_call.1} parent=1 // loop_footer
      %s22 = sadd.s32 1, %s18
    $region7: #{tpu_custom_call.1} parent=1 // loop_footer_branch
      %17 = sbr.rel target = $region3
    $region8: #{tpu_custom_call.1} parent=1 // loop_exit
      _
    %1330 = vsyncpa [#allocation6], 1
    %s1331 = scalar_lea.sflag [#allocation6], 1
    %1332 = vsyncpa %s1331, 1
    %1333 = vsyncpa [#allocation9], 1
    %1334 = vsyncpa [#allocation7], 1
    %s1335 = scalar_lea.sflag [#allocation7], 1
    %1336 = vsyncpa %s1335, 1

</llo_original>
